<compile_context>
chip_gen: v7x
topology: tpu7x:2x2x1
jax: 0.10.0
libtpu: 0.0.40
codegen_flags: <defaults>
</compile_context>

<pallas_src>
import functools
import math

import jax
import jax.numpy as jnp
from jax import lax
from jax.experimental import pallas as pl
from jax.experimental.pallas import tpu as pltpu


# Fits comfortably under v7x's 64 MiB physical VMEM, and below v5e/v6e's 128 MiB.
_VMEM_LIMIT = 48 * 1024 * 1024


def _pick_tile(n, candidates):
    """Largest candidate that divides n, else the full extent."""
    for t in candidates:
        if n % t == 0:
            return t
    return n


# ----------------------- Kernel A: LN + QKV + RoPE --------------------------


def _ln_qkv_rope_kernel(x_ref, g_ref, b_ref, w_ref, bias_ref, cos_ref, sin_ref,
                        q_ref, k_ref, v_ref):
    D = cos_ref.shape[-1]

    # LayerNorm over d_model (computed once, never written back to HBM).
    x = x_ref[0].astype(jnp.float32)                       # (ts, D)
    mean = jnp.mean(x, axis=-1, keepdims=True)
    var = jnp.mean(jnp.square(x - mean), axis=-1, keepdims=True)
    xn = (x - mean) * lax.rsqrt(var + 1e-5)
    xn = xn * g_ref[...] + b_ref[...]

    # Single lane-dense MXU matmul against [Wq | Wk | Wv | Wq*R | Wk*R]  -> (ts, 5D).
    qkv = jnp.dot(xn, w_ref[...], preferred_element_type=jnp.float32) + bias_ref[...]

    cos = cos_ref[...]                                     # (ts, D)
    sin = sin_ref[...]

    q = qkv[:, 0 * D:1 * D]
    k = qkv[:, 1 * D:2 * D]
    v = qkv[:, 2 * D:3 * D]
    q_rot = qkv[:, 3 * D:4 * D]                            # == q with (x0,x1)->(-x1,x0) per pair
    k_rot = qkv[:, 4 * D:5 * D]

    # RoPE (interleaved convention), fully elementwise on the VMEM tile.
    q_ref[0] = (q * cos + q_rot * sin).astype(q_ref.dtype)
    k_ref[0] = (k * cos + k_rot * sin).astype(k_ref.dtype)
    v_ref[0] = v.astype(v_ref.dtype)


def ln_qkv_rope(x, gamma, beta, w_qkv, b_qkv, cos, sin):
    B, S, D = x.shape
    ND = w_qkv.shape[1]                                    # 5*D
    ts = _pick_tile(S, (512, 256, 128, 64, 32, 16))        # sequence tile (full S when small)
    grid = (B, S // ts)

    M = B * S
    cost = pl.CostEstimate(
        flops=int(2 * M * D * ND + 12 * M * D),
        transcendentals=int(M),                            # rsqrt per row
        bytes_accessed=int(4 * (M * D + D * ND + ND + 2 * S * D + 3 * M * D + 2 * D)),
    )

    out_sds = jax.ShapeDtypeStruct((B, S, D), x.dtype)
    row_spec = pl.BlockSpec((1, ts, D), lambda b, s: (b, s, 0))

    return pl.pallas_call(
        _ln_qkv_rope_kernel,
        out_shape=(out_sds, out_sds, out_sds),
        grid_spec=pl.GridSpec(
            grid=grid,
            in_specs=[
                row_spec,                                            # x
                pl.BlockSpec((1, D), lambda b, s: (0, 0)),           # gamma
                pl.BlockSpec((1, D), lambda b, s: (0, 0)),           # beta
                pl.BlockSpec((D, ND), lambda b, s: (0, 0)),          # fused weight (VMEM-resident)
                pl.BlockSpec((1, ND), lambda b, s: (0, 0)),          # fused bias
                pl.BlockSpec((ts, D), lambda b, s: (s, 0)),          # cos table
                pl.BlockSpec((ts, D), lambda b, s: (s, 0)),          # sin table
            ],
            out_specs=(row_spec, row_spec, row_spec),
        ),
        compiler_params=pltpu.CompilerParams(
            dimension_semantics=("parallel", "parallel"),
            vmem_limit_bytes=_VMEM_LIMIT,
        ),
        cost_estimate=cost,
    )(x, gamma, beta, w_qkv, b_qkv, cos, sin)


# -------------------------- Kernel B: attention -----------------------------


def _attention_kernel(q_ref, k_ref, v_ref, o_ref, *, scale):
    # Block (1, H, S, Dh): all heads of one batch element per grid step, so per-step
    # overhead is amortized over H heads and QK^T / PV run as batched MXU contractions.
    q = q_ref[0].astype(jnp.float32)                       # (H, S, Dh)
    k = k_ref[0].astype(jnp.float32)
    v = v_ref[0].astype(jnp.float32)

    # scores[h,i,j] = sum_d q[h,i,d]*k[h,j,d]  -- contraction over last dims (no k.T relayout).
    s = lax.dot_general(q, k, dimension_numbers=(((2,), (2,)), ((0,), (0,))),
                        preferred_element_type=jnp.float32) * scale

    # TODO(synk): optional attention mask (mask=None in this module's forward) not applied.
    # TODO(synk): for long sequences switch to a flash-style streamed softmax over KV tiles
    #             (grid axis "arbitrary", online max/sum in VMEM scratch) instead of
    #             materializing the full (H, S, S) scores tile.
    m = jnp.max(s, axis=-1, keepdims=True)
    p = jnp.exp(s - m)
    denom = jnp.sum(p, axis=-1, keepdims=True)
    p = p * pl.reciprocal(denom, approx=True)              # EUP reciprocal (off the VALU path)

    o = lax.dot_general(p, v, dimension_numbers=(((2,), (1,)), ((0,), (0,))),
                        preferred_element_type=jnp.float32)
    o_ref[0] = o.astype(o_ref.dtype)


def attention(q, k, v, scale):
    # q, k, v: (B, H, S, Dh)
    B, H, S, Dh = q.shape
    cost = pl.CostEstimate(
        flops=int(B * H * (4 * S * S * Dh + 6 * S * S)),
        transcendentals=int(B * H * S * S),
        bytes_accessed=int(4 * 4 * B * H * S * Dh),
    )
    spec = pl.BlockSpec((1, H, S, Dh), lambda b: (b, 0, 0, 0))
    return pl.pallas_call(
        functools.partial(_attention_kernel, scale=scale),
        out_shape=jax.ShapeDtypeStruct((B, H, S, Dh), q.dtype),
        grid_spec=pl.GridSpec(grid=(B,), in_specs=[spec, spec, spec], out_specs=spec),
        compiler_params=pltpu.CompilerParams(
            dimension_semantics=("parallel",),
            vmem_limit_bytes=_VMEM_LIMIT,
        ),
        cost_estimate=cost,
    )(q, k, v)


# ---------------------- Kernel C: output projection --------------------------


def _linear_kernel(x_ref, w_ref, b_ref, o_ref):
    acc = jnp.dot(x_ref[...], w_ref[...], preferred_element_type=jnp.float32)
    o_ref[...] = (acc + b_ref[...]).astype(o_ref.dtype)


def linear(x2d, w, b):
    M, K = x2d.shape
    N = w.shape[1]
    bm = _pick_tile(M, (512, 256, 128, 64))                # M tiles; weight stays resident
    cost = pl.CostEstimate(
        flops=int(2 * M * K * N),
        transcendentals=0,
        bytes_accessed=int(4 * (M * K + K * N + N + M * N)),
    )
    return pl.pallas_call(
        _linear_kernel,
        out_shape=jax.ShapeDtypeStruct((M, N), x2d.dtype),
        grid_spec=pl.GridSpec(
            grid=(M // bm,),
            in_specs=[
                pl.BlockSpec((bm, K), lambda i: (i, 0)),
                pl.BlockSpec((K, N), lambda i: (0, 0)),
                pl.BlockSpec((1, N), lambda i: (0, 0)),
            ],
            out_specs=pl.BlockSpec((bm, N), lambda i: (i, 0)),
        ),
        compiler_params=pltpu.CompilerParams(
            dimension_semantics=("parallel",),
            vmem_limit_bytes=_VMEM_LIMIT,
        ),
        cost_estimate=cost,
    )(x2d, w, b)


# ------------------------------ JAX glue -------------------------------------


def precompute_freqs_complex(head_dim, seq_len, theta=10000.0):
    freqs = 1.0 / (theta ** (jnp.arange(0, head_dim, 2, dtype=jnp.float32) / head_dim))
    t = jnp.arange(seq_len, dtype=jnp.float32)
    angles = jnp.outer(t, freqs)                            # (S, Dh/2)
    return lax.complex(jnp.cos(angles), jnp.sin(angles))


def _pair_rotation_matrix(d_model):
    # R such that (x @ R)[..., 2i] = -x[..., 2i+1] and (x @ R)[..., 2i+1] = x[..., 2i].
    idx = jnp.arange(0, d_model, 2)
    R = jnp.zeros((d_model, d_model), jnp.float32)
    R = R.at[idx + 1, idx].set(-1.0)
    R = R.at[idx, idx + 1].set(1.0)
    return R


def init_params(key, d_model):
    ks = jax.random.split(key, 4)
    std = 0.02

    def lin(k):
        return (std * jax.random.normal(k, (d_model, d_model), jnp.float32),
                jnp.zeros((1, d_model), jnp.float32))

    wq, bq = lin(ks[0])
    wk, bk = lin(ks[1])
    wv, bv = lin(ks[2])
    wo, bo = lin(ks[3])
    return dict(
        ln_gamma=jnp.ones((1, d_model), jnp.float32),
        ln_beta=jnp.zeros((1, d_model), jnp.float32),
        wq=wq, bq=bq, wk=wk, bk=bk, wv=wv, bv=bv, wo=wo, bo=bo,
    )


def prepare_fused_params(params, d_model):
    """One-time parameter prep (cached alongside the module in real use)."""
    R = _pair_rotation_matrix(d_model)
    wq, wk, wv = params["wq"], params["wk"], params["wv"]
    bq, bk, bv = params["bq"], params["bk"], params["bv"]
    w_qkv = jnp.concatenate([wq, wk, wv, wq @ R, wk @ R], axis=1)   # (D, 5D)
    b_qkv = jnp.concatenate([bq, bk, bv, bq @ R, bk @ R], axis=1)   # (1, 5D)
    return dict(
        ln_gamma=params["ln_gamma"], ln_beta=params["ln_beta"],
        w_qkv=w_qkv, b_qkv=b_qkv,
        wo=params["wo"], bo=params["bo"],
    )


def multi_head_attention_module(x, freqs_complex, fused, n_heads, mask=None):
    # x: (B, S, D)
    if mask is not None:
        # TODO(synk): attention mask not wired into the Pallas kernel (forward uses mask=None).
        raise NotImplementedError("attention mask is not supported in this Pallas kernel")

    B, S, D = x.shape
    H = n_heads
    Dh = D // H
    scale = 1.0 / math.sqrt(Dh)

    # Expanded cos/sin tables (S, D): interleaved pairing, tiled across heads.
    cos = jnp.tile(jnp.repeat(jnp.real(freqs_complex).astype(jnp.float32), 2, axis=-1), (1, H))
    sin = jnp.tile(jnp.repeat(jnp.imag(freqs_complex).astype(jnp.float32), 2, axis=-1), (1, H))

    # Fused LayerNorm + QKV projection + RoPE (single Pallas kernel, x read once).
    q, k, v = ln_qkv_rope(x, fused["ln_gamma"], fused["ln_beta"],
                          fused["w_qkv"], fused["b_qkv"], cos, sin)   # each (B, S, D)

    # (B, S, D) -> (B, H, S, Dh).
    # TODO(synk): fold this head relayout into the projection kernel's out_specs
    #             (BlockSpec head indexing) to remove the remaining HBM transposes.
    def split_heads(t):
        return jnp.transpose(t.reshape(B, S, H, Dh), (0, 2, 1, 3))

    ctx = attention(split_heads(q), split_heads(k), split_heads(v), scale)  # (B, H, S, Dh)
    ctx = jnp.transpose(ctx, (0, 2, 1, 3)).reshape(B * S, D)

    # Output projection (tiled Pallas matmul).
    out = linear(ctx, fused["wo"], fused["bo"])

    # Dropout: eval-mode identity.
    # TODO(synk): training-mode dropout RNG (pltpu.prng_*) not implemented.
    return out.reshape(B, S, D)


# --------------------------- pure-JAX reference -------------------------------


def reference_forward(x, freqs_complex, params, n_heads):
    B, S, D = x.shape
    H, Dh = n_heads, D // n_heads

    mean = jnp.mean(x, axis=-1, keepdims=True)
    var = jnp.mean(jnp.square(x - mean), axis=-1, keepdims=True)
    xn = (x - mean) * lax.rsqrt(var + 1e-5) * params["ln_gamma"][0] + params["ln_beta"][0]
    x2 = xn.reshape(B * S, D)

    def proj(w, b):
        return (x2 @ w + b).reshape(B, S, H, Dh)

    q = proj(params["wq"], params["bq"])
    k = proj(params["wk"], params["bk"])
    v = proj(params["wv"], params["bv"])

    def rope(t):
        tr = t.reshape(B, S, H, Dh // 2, 2)
        tc = lax.complex(tr[..., 0], tr[..., 1])
        rot = tc * freqs_complex.reshape(1, S, 1, Dh // 2)
        return jnp.stack([jnp.real(rot), jnp.imag(rot)], axis=-1).reshape(B, S, H, Dh)

    q, k = rope(q), rope(k)
    q, k, v = (jnp.transpose(t, (0, 2, 1, 3)) for t in (q, k, v))
    s = jnp.einsum("bhqd,bhkd->bhqk", q, k) / math.sqrt(Dh)
    p = jax.nn.softmax(s, axis=-1)
    ctx = jnp.einsum("bhqk,bhkd->bhqd", p, v)
    ctx = jnp.transpose(ctx, (0, 2, 1, 3)).reshape(B * S, D)
    return (ctx @ params["wo"] + params["bo"]).reshape(B, S, D)


# -------------------------------- main ----------------------------------------


if __name__ == "__main__":
    B, S, D, H = 2, 16, 64, 4
    dropout = 0.1  # unused at eval time

    key = jax.random.PRNGKey(0)
    kx, kp = jax.random.split(key)
    x = jax.random.normal(kx, (B, S, D), jnp.float32)
    params = init_params(kp, D)
    fused = prepare_fused_params(params, D)
    freqs_complex = precompute_freqs_complex(D // H, S)

    fwd = jax.jit(functools.partial(multi_head_attention_module, n_heads=H))
    y = jax.block_until_ready(fwd(x, freqs_complex, fused))

    assert y.shape == (B, S, D) and y.dtype == jnp.float32

    # Numerical check vs pure-JAX reference (loose tolerance for the EUP approx reciprocal).
    y_ref = reference_forward(x, freqs_complex, params, H)
    rel_err = float(jnp.max(jnp.abs(y - y_ref)) / (jnp.max(jnp.abs(y_ref)) + 1e-6))
    assert rel_err < 5e-2, f"mismatch vs reference: rel_err={rel_err}"

    print("KERNEL_OK")
</pallas_src>

<mosaic_0001>
module attributes {stable_mosaic.version = 11 : i64} {
  func.func @_ln_qkv_rope_kernel(%arg0: i32, %arg1: i32, %arg2: memref<1x16x64xf32, #tpu.memory_space<vmem>>, %arg3: memref<1x64xf32, #tpu.memory_space<vmem>>, %arg4: memref<1x64xf32, #tpu.memory_space<vmem>>, %arg5: memref<64x320xf32, #tpu.memory_space<vmem>>, %arg6: memref<1x320xf32, #tpu.memory_space<vmem>>, %arg7: memref<16x64xf32, #tpu.memory_space<vmem>>, %arg8: memref<16x64xf32, #tpu.memory_space<vmem>>, %arg9: memref<1x16x64xf32, #tpu.memory_space<vmem>>, %arg10: memref<1x16x64xf32, #tpu.memory_space<vmem>>, %arg11: memref<1x16x64xf32, #tpu.memory_space<vmem>>) attributes {dimension_semantics = [#tpu.dimension_semantics<parallel>, #tpu.dimension_semantics<parallel>], iteration_bounds = array<i64: 2, 1>, scalar_prefetch = 0 : i64, scratch_operands = 0 : i64, tpu.core_type = #tpu.core_type<tc>, window_params = [{transform_indices = @transform_0, window_bounds = array<i64: 1, 16, 64>}, {pipeline_mode = #tpu.pipeline_mode<synchronous>, transform_indices = @transform_1, window_bounds = array<i64: 1, 64>}, {pipeline_mode = #tpu.pipeline_mode<synchronous>, transform_indices = @transform_2, window_bounds = array<i64: 1, 64>}, {pipeline_mode = #tpu.pipeline_mode<synchronous>, transform_indices = @transform_3, window_bounds = array<i64: 64, 320>}, {pipeline_mode = #tpu.pipeline_mode<synchronous>, transform_indices = @transform_4, window_bounds = array<i64: 1, 320>}, {transform_indices = @transform_5, window_bounds = array<i64: 16, 64>}, {transform_indices = @transform_6, window_bounds = array<i64: 16, 64>}, {transform_indices = @transform_7, window_bounds = array<i64: 1, 16, 64>}, {transform_indices = @transform_8, window_bounds = array<i64: 1, 16, 64>}, {transform_indices = @transform_9, window_bounds = array<i64: 1, 16, 64>}]} {
    %c0 = arith.constant 0 : index
    %c0_0 = arith.constant 0 : index
    %c0_1 = arith.constant 0 : index
    %0 = vector.load %arg2[%c0, %c0_0, %c0_1] : memref<1x16x64xf32, #tpu.memory_space<vmem>>, vector<1x16x64xf32>
    %1 = vector.shape_cast %0 : vector<1x16x64xf32> to vector<16x64xf32>
    %cst = arith.constant dense<0.000000e+00> : vector<16xf32>
    %2 = vector.multi_reduction <add>, %1, %cst [1] : vector<16x64xf32> to vector<16xf32>
    %3 = vector.shape_cast %2 : vector<16xf32> to vector<16x1xf32>
    %cst_2 = arith.constant 6.400000e+01 : f32
    %4 = vector.broadcast %cst_2 : f32 to vector<16x1xf32>
    %5 = arith.divf %3, %4 : vector<16x1xf32>
    %6 = vector.broadcast %5 : vector<16x1xf32> to vector<16x64xf32>
    %7 = arith.subf %1, %6 : vector<16x64xf32>
    %8 = arith.mulf %7, %7 : vector<16x64xf32>
    %cst_3 = arith.constant dense<0.000000e+00> : vector<16xf32>
    %9 = vector.multi_reduction <add>, %8, %cst_3 [1] : vector<16x64xf32> to vector<16xf32>
    %10 = vector.shape_cast %9 : vector<16xf32> to vector<16x1xf32>
    %cst_4 = arith.constant 6.400000e+01 : f32
    %11 = vector.broadcast %cst_4 : f32 to vector<16x1xf32>
    %12 = arith.divf %10, %11 : vector<16x1xf32>
    %13 = vector.broadcast %5 : vector<16x1xf32> to vector<16x64xf32>
    %14 = arith.subf %1, %13 : vector<16x64xf32>
    %cst_5 = arith.constant 9.99999974E-6 : f32
    %15 = vector.broadcast %cst_5 : f32 to vector<16x1xf32>
    %16 = arith.addf %12, %15 : vector<16x1xf32>
    %17 = math.rsqrt %16 : vector<16x1xf32>
    %18 = vector.broadcast %17 : vector<16x1xf32> to vector<16x64xf32>
    %19 = arith.mulf %14, %18 : vector<16x64xf32>
    %c0_6 = arith.constant 0 : index
    %c0_7 = arith.constant 0 : index
    %20 = vector.load %arg3[%c0_6, %c0_7] : memref<1x64xf32, #tpu.memory_space<vmem>>, vector<1x64xf32>
    %21 = vector.broadcast %20 : vector<1x64xf32> to vector<16x64xf32>
    %22 = arith.mulf %19, %21 : vector<16x64xf32>
    %c0_8 = arith.constant 0 : index
    %c0_9 = arith.constant 0 : index
    %23 = vector.load %arg4[%c0_8, %c0_9] : memref<1x64xf32, #tpu.memory_space<vmem>>, vector<1x64xf32>
    %24 = vector.broadcast %23 : vector<1x64xf32> to vector<16x64xf32>
    %25 = arith.addf %22, %24 : vector<16x64xf32>
    %c0_10 = arith.constant 0 : index
    %c0_11 = arith.constant 0 : index
    %26 = vector.load %arg5[%c0_10, %c0_11] : memref<64x320xf32, #tpu.memory_space<vmem>>, vector<64x320xf32>
    %cst_12 = arith.constant dense<0.000000e+00> : vector<16x320xf32>
    %27 = tpu.matmul %25, %26, %cst_12 {dimension_numbers = #tpu.dot_dimension_numbers<[1], [0], [0], [1], [0, 0, 1, 1], [], []>} : vector<16x64xf32>, vector<64x320xf32>, vector<16x320xf32> -> vector<16x320xf32>
    %c0_13 = arith.constant 0 : index
    %c0_14 = arith.constant 0 : index
    %28 = vector.load %arg6[%c0_13, %c0_14] : memref<1x320xf32, #tpu.memory_space<vmem>>, vector<1x320xf32>
    %29 = vector.broadcast %28 : vector<1x320xf32> to vector<16x320xf32>
    %30 = arith.addf %27, %29 : vector<16x320xf32>
    %c0_15 = arith.constant 0 : index
    %c0_16 = arith.constant 0 : index
    %31 = vector.load %arg7[%c0_15, %c0_16] : memref<16x64xf32, #tpu.memory_space<vmem>>, vector<16x64xf32>
    %c0_17 = arith.constant 0 : index
    %c0_18 = arith.constant 0 : index
    %32 = vector.load %arg8[%c0_17, %c0_18] : memref<16x64xf32, #tpu.memory_space<vmem>>, vector<16x64xf32>
    %33 = vector.extract_strided_slice %30 {offsets = [0, 0], sizes = [16, 64], strides = [1, 1]} : vector<16x320xf32> to vector<16x64xf32>
    %34 = vector.extract_strided_slice %30 {offsets = [0, 64], sizes = [16, 64], strides = [1, 1]} : vector<16x320xf32> to vector<16x64xf32>
    %35 = vector.extract_strided_slice %30 {offsets = [0, 128], sizes = [16, 64], strides = [1, 1]} : vector<16x320xf32> to vector<16x64xf32>
    %36 = vector.extract_strided_slice %30 {offsets = [0, 192], sizes = [16, 64], strides = [1, 1]} : vector<16x320xf32> to vector<16x64xf32>
    %37 = vector.extract_strided_slice %30 {offsets = [0, 256], sizes = [16, 64], strides = [1, 1]} : vector<16x320xf32> to vector<16x64xf32>
    %38 = arith.mulf %33, %31 : vector<16x64xf32>
    %39 = arith.mulf %36, %32 : vector<16x64xf32>
    %40 = arith.addf %38, %39 : vector<16x64xf32>
    %c0_19 = arith.constant 0 : index
    %c0_20 = arith.constant 0 : index
    %c0_21 = arith.constant 0 : index
    %41 = vector.load %arg9[%c0_19, %c0_20, %c0_21] : memref<1x16x64xf32, #tpu.memory_space<vmem>>, vector<1x16x64xf32>
    %42 = vector.shape_cast %41 : vector<1x16x64xf32> to vector<16x64xf32>
    %43 = vector.shape_cast %40 : vector<16x64xf32> to vector<1x16x64xf32>
    tpu.vector_store %arg9[%c0_19, %c0_20, %c0_21], %43 {strides = array<i32>} : memref<1x16x64xf32, #tpu.memory_space<vmem>>, vector<1x16x64xf32>,
    %44 = arith.mulf %34, %31 : vector<16x64xf32>
    %45 = arith.mulf %37, %32 : vector<16x64xf32>
    %46 = arith.addf %44, %45 : vector<16x64xf32>
    %c0_22 = arith.constant 0 : index
    %c0_23 = arith.constant 0 : index
    %c0_24 = arith.constant 0 : index
    %47 = vector.load %arg10[%c0_22, %c0_23, %c0_24] : memref<1x16x64xf32, #tpu.memory_space<vmem>>, vector<1x16x64xf32>
    %48 = vector.shape_cast %47 : vector<1x16x64xf32> to vector<16x64xf32>
    %49 = vector.shape_cast %46 : vector<16x64xf32> to vector<1x16x64xf32>
    tpu.vector_store %arg10[%c0_22, %c0_23, %c0_24], %49 {strides = array<i32>} : memref<1x16x64xf32, #tpu.memory_space<vmem>>, vector<1x16x64xf32>,
    %c0_25 = arith.constant 0 : index
    %c0_26 = arith.constant 0 : index
    %c0_27 = arith.constant 0 : index
    %50 = vector.load %arg11[%c0_25, %c0_26, %c0_27] : memref<1x16x64xf32, #tpu.memory_space<vmem>>, vector<1x16x64xf32>
    %51 = vector.shape_cast %50 : vector<1x16x64xf32> to vector<16x64xf32>
    %52 = vector.shape_cast %35 : vector<16x64xf32> to vector<1x16x64xf32>
    tpu.vector_store %arg11[%c0_25, %c0_26, %c0_27], %52 {strides = array<i32>} : memref<1x16x64xf32, #tpu.memory_space<vmem>>, vector<1x16x64xf32>,
    return
  }
  func.func @transform_0(%arg0: i32, %arg1: i32) -> (i32, i32, i32) {
    %c0_i32 = arith.constant 0 : i32
    %c0_i32_0 = arith.constant 0 : i32
    return %arg0, %arg1, %c0_i32 : i32, i32, i32
  }
  func.func @transform_1(%arg0: i32, %arg1: i32) -> (i32, i32) {
    %c0_i32 = arith.constant 0 : i32
    %c0_i32_0 = arith.constant 0 : i32
    %c0_i32_1 = arith.constant 0 : i32
    return %c0_i32, %c0_i32_0 : i32, i32
  }
  func.func @transform_2(%arg0: i32, %arg1: i32) -> (i32, i32) {
    %c0_i32 = arith.constant 0 : i32
    %c0_i32_0 = arith.constant 0 : i32
    %c0_i32_1 = arith.constant 0 : i32
    return %c0_i32, %c0_i32_0 : i32, i32
  }
  func.func @transform_3(%arg0: i32, %arg1: i32) -> (i32, i32) {
    %c0_i32 = arith.constant 0 : i32
    %c0_i32_0 = arith.constant 0 : i32
    %c0_i32_1 = arith.constant 0 : i32
    return %c0_i32, %c0_i32_0 : i32, i32
  }
  func.func @transform_4(%arg0: i32, %arg1: i32) -> (i32, i32) {
    %c0_i32 = arith.constant 0 : i32
    %c0_i32_0 = arith.constant 0 : i32
    %c0_i32_1 = arith.constant 0 : i32
    return %c0_i32, %c0_i32_0 : i32, i32
  }
  func.func @transform_5(%arg0: i32, %arg1: i32) -> (i32, i32) {
    %c0_i32 = arith.constant 0 : i32
    %c0_i32_0 = arith.constant 0 : i32
    return %arg1, %c0_i32 : i32, i32
  }
  func.func @transform_6(%arg0: i32, %arg1: i32) -> (i32, i32) {
    %c0_i32 = arith.constant 0 : i32
    %c0_i32_0 = arith.constant 0 : i32
    return %arg1, %c0_i32 : i32, i32
  }
  func.func @transform_7(%arg0: i32, %arg1: i32) -> (i32, i32, i32) {
    %c0_i32 = arith.constant 0 : i32
    %c0_i32_0 = arith.constant 0 : i32
    return %arg0, %arg1, %c0_i32 : i32, i32, i32
  }
  func.func @transform_8(%arg0: i32, %arg1: i32) -> (i32, i32, i32) {
    %c0_i32 = arith.constant 0 : i32
    %c0_i32_0 = arith.constant 0 : i32
    return %arg0, %arg1, %c0_i32 : i32, i32, i32
  }
  func.func @transform_9(%arg0: i32, %arg1: i32) -> (i32, i32, i32) {
    %c0_i32 = arith.constant 0 : i32
    %c0_i32_0 = arith.constant 0 : i32
    return %arg0, %arg1, %c0_i32 : i32, i32, i32
  }
}

module attributes {stable_mosaic.version = 11 : i64} {
  func.func @_attention_kernel(%arg0: i32, %arg1: memref<1x4x16x16xf32, #tpu.memory_space<vmem>>, %arg2: memref<1x4x16x16xf32, #tpu.memory_space<vmem>>, %arg3: memref<1x4x16x16xf32, #tpu.memory_space<vmem>>, %arg4: memref<1x4x16x16xf32, #tpu.memory_space<vmem>>) attributes {dimension_semantics = [#tpu.dimension_semantics<parallel>], iteration_bounds = array<i64: 2>, scalar_prefetch = 0 : i64, scratch_operands = 0 : i64, tpu.core_type = #tpu.core_type<tc>, window_params = [{transform_indices = @transform_0, window_bounds = array<i64: 1, 4, 16, 16>}, {transform_indices = @transform_1, window_bounds = array<i64: 1, 4, 16, 16>}, {transform_indices = @transform_2, window_bounds = array<i64: 1, 4, 16, 16>}, {transform_indices = @transform_3, window_bounds = array<i64: 1, 4, 16, 16>}]} {
    %c0 = arith.constant 0 : index
    %c0_0 = arith.constant 0 : index
    %c0_1 = arith.constant 0 : index
    %c0_2 = arith.constant 0 : index
    %0 = vector.load %arg1[%c0, %c0_0, %c0_1, %c0_2] : memref<1x4x16x16xf32, #tpu.memory_space<vmem>>, vector<1x4x16x16xf32>
    %1 = vector.shape_cast %0 : vector<1x4x16x16xf32> to vector<4x16x16xf32>
    %c0_3 = arith.constant 0 : index
    %c0_4 = arith.constant 0 : index
    %c0_5 = arith.constant 0 : index
    %c0_6 = arith.constant 0 : index
    %2 = vector.load %arg2[%c0_3, %c0_4, %c0_5, %c0_6] : memref<1x4x16x16xf32, #tpu.memory_space<vmem>>, vector<1x4x16x16xf32>
    %3 = vector.shape_cast %2 : vector<1x4x16x16xf32> to vector<4x16x16xf32>
    %c0_7 = arith.constant 0 : index
    %c0_8 = arith.constant 0 : index
    %c0_9 = arith.constant 0 : index
    %c0_10 = arith.constant 0 : index
    %4 = vector.load %arg3[%c0_7, %c0_8, %c0_9, %c0_10] : memref<1x4x16x16xf32, #tpu.memory_space<vmem>>, vector<1x4x16x16xf32>
    %5 = vector.shape_cast %4 : vector<1x4x16x16xf32> to vector<4x16x16xf32>
    %cst = arith.constant dense<0.000000e+00> : vector<4x16x16xf32>
    %6 = tpu.matmul %1, %3, %cst {dimension_numbers = #tpu.dot_dimension_numbers<[2], [2], [1], [1], [0, 0, 0, 1, 1, 1], [0], [0]>} : vector<4x16x16xf32>, vector<4x16x16xf32>, vector<4x16x16xf32> -> vector<4x16x16xf32>
    %cst_11 = arith.constant 2.500000e-01 : f32
    %7 = vector.broadcast %cst_11 : f32 to vector<4x16x16xf32>
    %8 = arith.mulf %6, %7 : vector<4x16x16xf32>
    %cst_12 = arith.constant dense<0xFF800000> : vector<4x16xf32>
    %9 = vector.multi_reduction <maximumf>, %8, %cst_12 [2] : vector<4x16x16xf32> to vector<4x16xf32>
    %10 = vector.shape_cast %9 : vector<4x16xf32> to vector<4x16x1xf32>
    %11 = vector.broadcast %10 : vector<4x16x1xf32> to vector<4x16x16xf32>
    %12 = arith.subf %8, %11 : vector<4x16x16xf32>
    %13 = math.exp %12 : vector<4x16x16xf32>
    %cst_13 = arith.constant dense<0.000000e+00> : vector<4x16xf32>
    %14 = vector.multi_reduction <add>, %13, %cst_13 [2] : vector<4x16x16xf32> to vector<4x16xf32>
    %15 = vector.shape_cast %14 : vector<4x16xf32> to vector<4x16x1xf32>
    %16 = tpu.reciprocal %15 {approx = true} : vector<4x16x1xf32> -> vector<4x16x1xf32>
    %17 = vector.broadcast %16 : vector<4x16x1xf32> to vector<4x16x16xf32>
    %18 = arith.mulf %13, %17 : vector<4x16x16xf32>
    %cst_14 = arith.constant dense<0.000000e+00> : vector<4x16x16xf32>
    %19 = tpu.matmul %18, %5, %cst_14 {dimension_numbers = #tpu.dot_dimension_numbers<[2], [1], [1], [2], [0, 0, 0, 1, 1, 2], [0], [0]>} : vector<4x16x16xf32>, vector<4x16x16xf32>, vector<4x16x16xf32> -> vector<4x16x16xf32>
    %c0_15 = arith.constant 0 : index
    %c0_16 = arith.constant 0 : index
    %c0_17 = arith.constant 0 : index
    %c0_18 = arith.constant 0 : index
    %20 = vector.load %arg4[%c0_15, %c0_16, %c0_17, %c0_18] : memref<1x4x16x16xf32, #tpu.memory_space<vmem>>, vector<1x4x16x16xf32>
    %21 = vector.shape_cast %20 : vector<1x4x16x16xf32> to vector<4x16x16xf32>
    %22 = vector.shape_cast %19 : vector<4x16x16xf32> to vector<1x4x16x16xf32>
    tpu.vector_store %arg4[%c0_15, %c0_16, %c0_17, %c0_18], %22 {strides = array<i32>} : memref<1x4x16x16xf32, #tpu.memory_space<vmem>>, vector<1x4x16x16xf32>,
    return
  }
  func.func @transform_0(%arg0: i32) -> (i32, i32, i32, i32) {
    %c0_i32 = arith.constant 0 : i32
    %c0_i32_0 = arith.constant 0 : i32
    %c0_i32_1 = arith.constant 0 : i32
    %c0_i32_2 = arith.constant 0 : i32
    return %arg0, %c0_i32, %c0_i32_0, %c0_i32_1 : i32, i32, i32, i32
  }
  func.func @transform_1(%arg0: i32) -> (i32, i32, i32, i32) {
    %c0_i32 = arith.constant 0 : i32
    %c0_i32_0 = arith.constant 0 : i32
    %c0_i32_1 = arith.constant 0 : i32
    %c0_i32_2 = arith.constant 0 : i32
    return %arg0, %c0_i32, %c0_i32_0, %c0_i32_1 : i32, i32, i32, i32
  }
  func.func @transform_2(%arg0: i32) -> (i32, i32, i32, i32) {
    %c0_i32 = arith.constant 0 : i32
    %c0_i32_0 = arith.constant 0 : i32
    %c0_i32_1 = arith.constant 0 : i32
    %c0_i32_2 = arith.constant 0 : i32
    return %arg0, %c0_i32, %c0_i32_0, %c0_i32_1 : i32, i32, i32, i32
  }
  func.func @transform_3(%arg0: i32) -> (i32, i32, i32, i32) {
    %c0_i32 = arith.constant 0 : i32
    %c0_i32_0 = arith.constant 0 : i32
    %c0_i32_1 = arith.constant 0 : i32
    %c0_i32_2 = arith.constant 0 : i32
    return %arg0, %c0_i32, %c0_i32_0, %c0_i32_1 : i32, i32, i32, i32
  }
}

module attributes {stable_mosaic.version = 11 : i64} {
  func.func @_linear_kernel(%arg0: i32, %arg1: memref<32x64xf32, #tpu.memory_space<vmem>>, %arg2: memref<64x64xf32, #tpu.memory_space<vmem>>, %arg3: memref<1x64xf32, #tpu.memory_space<vmem>>, %arg4: memref<32x64xf32, #tpu.memory_space<vmem>>) attributes {dimension_semantics = [#tpu.dimension_semantics<parallel>], iteration_bounds = array<i64: 1>, scalar_prefetch = 0 : i64, scratch_operands = 0 : i64, tpu.core_type = #tpu.core_type<tc>, window_params = [{transform_indices = @transform_0, window_bounds = array<i64: 32, 64>}, {pipeline_mode = #tpu.pipeline_mode<synchronous>, transform_indices = @transform_1, window_bounds = array<i64: 64, 64>}, {pipeline_mode = #tpu.pipeline_mode<synchronous>, transform_indices = @transform_2, window_bounds = array<i64: 1, 64>}, {transform_indices = @transform_3, window_bounds = array<i64: 32, 64>}]} {
    %c0 = arith.constant 0 : index
    %c0_0 = arith.constant 0 : index
    %0 = vector.load %arg1[%c0, %c0_0] : memref<32x64xf32, #tpu.memory_space<vmem>>, vector<32x64xf32>
    %c0_1 = arith.constant 0 : index
    %c0_2 = arith.constant 0 : index
    %1 = vector.load %arg2[%c0_1, %c0_2] : memref<64x64xf32, #tpu.memory_space<vmem>>, vector<64x64xf32>
    %cst = arith.constant dense<0.000000e+00> : vector<32x64xf32>
    %2 = tpu.matmul %0, %1, %cst {dimension_numbers = #tpu.dot_dimension_numbers<[1], [0], [0], [1], [0, 0, 1, 1], [], []>} : vector<32x64xf32>, vector<64x64xf32>, vector<32x64xf32> -> vector<32x64xf32>
    %c0_3 = arith.constant 0 : index
    %c0_4 = arith.constant 0 : index
    %3 = vector.load %arg3[%c0_3, %c0_4] : memref<1x64xf32, #tpu.memory_space<vmem>>, vector<1x64xf32>
    %4 = vector.broadcast %3 : vector<1x64xf32> to vector<32x64xf32>
    %5 = arith.addf %2, %4 : vector<32x64xf32>
    %c0_5 = arith.constant 0 : index
    %c0_6 = arith.constant 0 : index
    %6 = vector.load %arg4[%c0_5, %c0_6] : memref<32x64xf32, #tpu.memory_space<vmem>>, vector<32x64xf32>
    tpu.vector_store %arg4[%c0_5, %c0_6], %5 {strides = array<i32>} : memref<32x64xf32, #tpu.memory_space<vmem>>, vector<32x64xf32>,
    return
  }
  func.func @transform_0(%arg0: i32) -> (i32, i32) {
    %c0_i32 = arith.constant 0 : i32
    %c0_i32_0 = arith.constant 0 : i32
    return %arg0, %c0_i32 : i32, i32
  }
  func.func @transform_1(%arg0: i32) -> (i32, i32) {
    %c0_i32 = arith.constant 0 : i32
    %c0_i32_0 = arith.constant 0 : i32
    %c0_i32_1 = arith.constant 0 : i32
    return %c0_i32, %c0_i32_0 : i32, i32
  }
  func.func @transform_2(%arg0: i32) -> (i32, i32) {
    %c0_i32 = arith.constant 0 : i32
    %c0_i32_0 = arith.constant 0 : i32
    %c0_i32_1 = arith.constant 0 : i32
    return %c0_i32, %c0_i32_0 : i32, i32
  }
  func.func @transform_3(%arg0: i32) -> (i32, i32) {
    %c0_i32 = arith.constant 0 : i32
    %c0_i32_0 = arith.constant 0 : i32
    return %arg0, %c0_i32 : i32, i32
  }
}

</mosaic_0001>

<llo_original>
// kernel: custom-call
$region0: #{custom-call}
  %s0 = inlined_call_operand.hbm [shape: c64[16,8], index: 0, kind: input, shape index: {}]
  %s1 = inlined_call_operand.vmem [shape: f32[16,8], index: 1, kind: output, shape index: {}]
  $region1: #{custom-call} parent=0
    #allocation0 [shape = 's32[1]{0}', space=sflag, size = 0x4, scoped, tag = 'scoped memory for custom-call']
    %2 = vsyncpa [#allocation0], 0
    %s3 = sshll.u32 %s1, 4
    %s4 = int_to_ptr.vmem [resolvable:$true] %s3
    %6 = dma.hbm_to_vmem [thread:$0]  %s0, 128, %s4, [#allocation0]
    %7 = dma.done [#allocation0], 128
    %8 = vsyncpa [#allocation0], 1

// kernel: custom-call.1
$region0: #{custom-call.1}
  %s0 = inlined_call_operand.hbm [shape: c64[16,8], index: 0, kind: input, shape index: {}]
  %s1 = inlined_call_operand.vmem [shape: f32[16,8], index: 1, kind: output, shape index: {}]
  %s2 = scalar_lea.hbm %s0, 128
  $region1: #{custom-call.1} parent=0
    #allocation0 [shape = 's32[1]{0}', space=sflag, size = 0x4, scoped, tag = 'scoped memory for custom-call.1']
    %3 = vsyncpa [#allocation0], 0
    %s4 = sshll.u32 %s1, 4
    %s5 = int_to_ptr.vmem [resolvable:$true] %s4
    %7 = dma.hbm_to_vmem [thread:$0]  %s2, 128, %s5, [#allocation0]
    %8 = dma.done [#allocation0], 128
    %9 = vsyncpa [#allocation0], 1

// kernel: tile.11
$region0: #{tile.11}
  %s0 = inlined_call_operand.vmem [shape: f32[16,4,16], index: 0, kind: input, shape index: {}]
  %s1 = inlined_call_operand.vmem [shape: f32[16,64], index: 1, kind: output, shape index: {}]
  $region1: #{tile.11} parent=0
    #allocation0 [shape = 'u8[65536]{0}', space=vmem, size = 0x10000, scoped, tag = 'scoped mem for input reshape']
    %s3 = sshllo.u32 0, 4
    %s4 = smul.addr 4, 15
    %s5 = scalar_lea.vmem %s0, %s4
    %v6 = vld [vmem:[%s5] sm:%s3]
    %s7 = scalar_lea.vmem [#allocation0], 120
    %8 = vst [vmem:[%s7] sm:%s3] %v6
    %s9 = smul.addr 4, 14
    %s10 = scalar_lea.vmem %s0, %s9
    %v11 = vld [vmem:[%s10] sm:%s3]
    %s12 = scalar_lea.vmem [#allocation0], 112
    %13 = vst [vmem:[%s12] sm:%s3] %v11
    %s14 = smul.addr 4, 13
    %s15 = scalar_lea.vmem %s0, %s14
    %v16 = vld [vmem:[%s15] sm:%s3]
    %s17 = scalar_lea.vmem [#allocation0], 104
    %18 = vst [vmem:[%s17] sm:%s3] %v16
    %s19 = smul.addr 4, 12
    %s20 = scalar_lea.vmem %s0, %s19
    %v21 = vld [vmem:[%s20] sm:%s3]
    %s22 = scalar_lea.vmem [#allocation0], 96
    %23 = vst [vmem:[%s22] sm:%s3] %v21
    %s24 = smul.addr 4, 11
    %s25 = scalar_lea.vmem %s0, %s24
    %v26 = vld [vmem:[%s25] sm:%s3]
    %s27 = scalar_lea.vmem [#allocation0], 88
    %28 = vst [vmem:[%s27] sm:%s3] %v26
    %s29 = smul.addr 4, 10
    %s30 = scalar_lea.vmem %s0, %s29
    %v31 = vld [vmem:[%s30] sm:%s3]
    %s32 = scalar_lea.vmem [#allocation0], 80
    %33 = vst [vmem:[%s32] sm:%s3] %v31
    %s34 = smul.addr 4, 9
    %s35 = scalar_lea.vmem %s0, %s34
    %v36 = vld [vmem:[%s35] sm:%s3]
    %s37 = scalar_lea.vmem [#allocation0], 72
    %38 = vst [vmem:[%s37] sm:%s3] %v36
    %s39 = smul.addr 4, 8
    %s40 = scalar_lea.vmem %s0, %s39
    %v41 = vld [vmem:[%s40] sm:%s3]
    %s42 = scalar_lea.vmem [#allocation0], 64
    %43 = vst [vmem:[%s42] sm:%s3] %v41
    %s44 = smul.addr 4, 7
    %s45 = scalar_lea.vmem %s0, %s44
    %v46 = vld [vmem:[%s45] sm:%s3]
    %s47 = scalar_lea.vmem [#allocation0], 56
    %48 = vst [vmem:[%s47] sm:%s3] %v46
    %s49 = smul.addr 4, 6
    %s50 = scalar_lea.vmem %s0, %s49
    %v51 = vld [vmem:[%s50] sm:%s3]
    %s52 = scalar_lea.vmem [#allocation0], 48
    %53 = vst [vmem:[%s52] sm:%s3] %v51
    %s54 = smul.addr 4, 5
    %s55 = scalar_lea.vmem %s0, %s54
    %v56 = vld [vmem:[%s55] sm:%s3]
    %s57 = scalar_lea.vmem [#allocation0], 40
    %58 = vst [vmem:[%s57] sm:%s3] %v56
    %s59 = smul.addr 4, 4
    %s60 = scalar_lea.vmem %s0, %s59
    %v61 = vld [vmem:[%s60] sm:%s3]
    %s62 = scalar_lea.vmem [#allocation0], 32
    %63 = vst [vmem:[%s62] sm:%s3] %v61
    %s64 = smul.addr 4, 3
    %s65 = scalar_lea.vmem %s0, %s64
    %v66 = vld [vmem:[%s65] sm:%s3]
    %s67 = scalar_lea.vmem [#allocation0], 24
    %68 = vst [vmem:[%s67] sm:%s3] %v66
    %s69 = smul.addr 4, 2
    %s70 = scalar_lea.vmem %s0, %s69
    %v71 = vld [vmem:[%s70] sm:%s3]
    %s72 = scalar_lea.vmem [#allocation0], 16
    %73 = vst [vmem:[%s72] sm:%s3] %v71
    %s74 = scalar_lea.vmem %s0, 4
    %v75 = vld [vmem:[%s74] sm:%s3]
    %s76 = scalar_lea.vmem [#allocation0], 8
    %77 = vst [vmem:[%s76] sm:%s3] %v75
    %v78 = vld [vmem:[%s0] sm:%s3]
    %79 = vst [vmem:[#allocation0] sm:%s3] %v78
    %v80 = vld [vmem:[#allocation0] ss:$8 sm:$0xf]
    %v81 = vld [vmem:[#allocation0] ss:$8 sm:$0xf0]
    %vm82 = vcmask 1047556
    %v83 = vsel %vm82, %v81, %v80
    %vm84 = vcmask 130048
    %85 = vst.msk [vmem:[%s1] sm:$0xff] %vm84, %v83
    %s86 = scalar_lea.vmem [#allocation0], 64
    %v87 = vld [vmem:[%s86] ss:$8 sm:$0xf]
    %s88 = scalar_lea.vmem [#allocation0], 64
    %v89 = vld [vmem:[%s88] ss:$8 sm:$0xf0]
    %vm90 = vcmask 1047556
    %v91 = vsel %vm90, %v89, %v87
    %vm92 = vcmask 130048
    %s93 = scalar_lea.vmem %s1, 8
    %94 = vst.msk [vmem:[%s93] sm:$0xff] %vm92, %v91
    %s95 = scalar_lea.vmem [#allocation0], 3
    %v96 = vld [vmem:[%s95] ss:$8 sm:$0xf]
    %s97 = scalar_lea.vmem [#allocation0], 3
    %v98 = vld [vmem:[%s97] ss:$8 sm:$0xf0]
    %vm99 = vcmask 1047556
    %v100 = vsel %vm99, %v98, %v96
    %101 = vrot.lane.b32.xlu0 %v100, 48
    %v102 = vpop.permute.xlu0 %101
    %vm103 = vcmask 523648
    %104 = vst.msk [vmem:[%s1] sm:$0xff] %vm103, %v102
    %s105 = scalar_lea.vmem [#allocation0], 67
    %v106 = vld [vmem:[%s105] ss:$8 sm:$0xf]
    %s107 = scalar_lea.vmem [#allocation0], 67
    %v108 = vld [vmem:[%s107] ss:$8 sm:$0xf0]
    %vm109 = vcmask 1047556
    %v110 = vsel %vm109, %v108, %v106
    %111 = vrot.lane.b32.xlu0 %v110, 48
    %v112 = vpop.permute.xlu0 %111
    %vm113 = vcmask 523648
    %s114 = scalar_lea.vmem %s1, 8
    %115 = vst.msk [vmem:[%s114] sm:$0xff] %vm113, %v112
    %s116 = scalar_lea.vmem [#allocation0], 2
    %v117 = vld [vmem:[%s116] ss:$8 sm:$0xf]
    %s118 = scalar_lea.vmem [#allocation0], 2
    %v119 = vld [vmem:[%s118] ss:$8 sm:$0xf0]
    %vm120 = vcmask 1047556
    %v121 = vsel %vm120, %v119, %v117
    %122 = vrot.lane.b32.xlu0 %v121, 32
    %v123 = vpop.permute.xlu0 %122
    %vm124 = vcmask 392448
    %125 = vst.msk [vmem:[%s1] sm:$0xff] %vm124, %v123
    %s126 = scalar_lea.vmem [#allocation0], 66
    %v127 = vld [vmem:[%s126] ss:$8 sm:$0xf]
    %s128 = scalar_lea.vmem [#allocation0], 66
    %v129 = vld [vmem:[%s128] ss:$8 sm:$0xf0]
    %vm130 = vcmask 1047556
    %v131 = vsel %vm130, %v129, %v127
    %132 = vrot.lane.b32.xlu0 %v131, 32
    %v133 = vpop.permute.xlu0 %132
    %vm134 = vcmask 392448
    %s135 = scalar_lea.vmem %s1, 8
    %136 = vst.msk [vmem:[%s135] sm:$0xff] %vm134, %v133
    %s137 = scalar_lea.vmem [#allocation0], 1
    %v138 = vld [vmem:[%s137] ss:$8 sm:$0xf]
    %s139 = scalar_lea.vmem [#allocation0], 1
    %v140 = vld [vmem:[%s139] ss:$8 sm:$0xf0]
    %vm141 = vcmask 1047556
    %v142 = vsel %vm141, %v140, %v138
    %143 = vrot.lane.b32.xlu0 %v142, 16
    %v144 = vpop.permute.xlu0 %143
    %vm145 = vcmask 261248
    %146 = vst.msk [vmem:[%s1] sm:$0xff] %vm145, %v144
    %s147 = scalar_lea.vmem [#allocation0], 65
    %v148 = vld [vmem:[%s147] ss:$8 sm:$0xf]
    %s149 = scalar_lea.vmem [#allocation0], 65
    %v150 = vld [vmem:[%s149] ss:$8 sm:$0xf0]
    %vm151 = vcmask 1047556
    %v152 = vsel %vm151, %v150, %v148
    %153 = vrot.lane.b32.xlu0 %v152, 16
    %v154 = vpop.permute.xlu0 %153
    %vm155 = vcmask 261248
    %s156 = scalar_lea.vmem %s1, 8
    %157 = vst.msk [vmem:[%s156] sm:$0xff] %vm155, %v154

// kernel: multi_head_attention_module.5
$region0: #{multi_head_attention_module.5}
  #allocation0 [shape = 'u32[]', space=smem, size = 0x4, offset = 0x4, fixed_abs, tag = 'smem constant byte address 0x4 - core index']
  #allocation1 [shape = 'u32[144,128]{1,0:T(1,128)}', space=vmem, size = 0x12000, scoped, tag = 'internal scratch']
  %s0 = inlined_call_operand.vmem [shape: f32[32,64], index: 0, kind: input, shape index: {}]
  %s1 = inlined_call_operand.vmem [shape: f32[64,64], index: 1, kind: input, shape index: {}]
  %s2 = inlined_call_operand.vmem [shape: f32[1,64], index: 2, kind: input, shape index: {}]
  %s3 = inlined_call_operand.hbm [shape: f32[32,64], index: 3, kind: output, shape index: {}]
  %s4 = sld [smem:[#allocation0]]
  $region22: #{multi_head_attention_module.5} parent=0
    _
  %s6 = ssub.s32 1, %s4
  %s7 = scalar_select 0, %s6, %s4
  $region1: #{multi_head_attention_module.5} parent=0
    #allocation2 [shape = 'u8[16384]{0}', space=vmem, size = 0x4000, scoped, tag = 'output window, operand 0, single buffered']
    #allocation3 [shape = 's32[1]{0}', space=sflag, size = 0x4, scoped, tag = 'scoped memory for multi_head_attention_module.5']
    %8 = vsyncpa [#allocation3], 0
    // Predicated region
    $region2: #{multi_head_attention_module.5} parent=1 // pred_check
      _
    $region3: #{multi_head_attention_module.5} parent=1 // pred_check_branch
      %10 = sbr.rel (0) target = $region5
    $region4: #{multi_head_attention_module.5} parent=1 // pred_region
      _
    $region5: #{multi_head_attention_module.5} parent=1 // pred_fallthru
      _
    // Predicated region
    $region6: #{multi_head_attention_module.5} parent=1 // pred_check
      _
    $region7: #{multi_head_attention_module.5} parent=1 // pred_check_branch
      %12 = sbr.rel (0) target = $region9
    $region8: #{multi_head_attention_module.5} parent=1 // pred_region
      _
    $region9: #{multi_head_attention_module.5} parent=1 // pred_fallthru
      _
    // Predicated region
    $region10: #{multi_head_attention_module.5} parent=1 // pred_check
      _
    $region11: #{multi_head_attention_module.5} parent=1 // pred_check_branch
      %14 = sbr.rel (0) target = $region13
    $region12: #{multi_head_attention_module.5} parent=1 // pred_region
      _
    $region13: #{multi_head_attention_module.5} parent=1 // pred_fallthru
      _
    %v15 = vld [vmem:[%s0] sm:$0xff]
    %v16 = vld [vmem:[%s0 + $0x8] sm:$0xff]
    %v17 = vld [vmem:[%s0 + $0x10] sm:$0xff]
    %v18 = vld [vmem:[%s0 + $0x18] sm:$0xff]
    %v19 = vld [vmem:[%s1] sm:$0xff]
    %v20 = vld [vmem:[%s1 + $0x8] sm:$0xff]
    %v21 = vld [vmem:[%s1 + $0x10] sm:$0xff]
    %v22 = vld [vmem:[%s1 + $0x18] sm:$0xff]
    %v23 = vld [vmem:[%s1 + $0x20] sm:$0xff]
    %v24 = vld [vmem:[%s1 + $0x28] sm:$0xff]
    %v25 = vld [vmem:[%s1 + $0x30] sm:$0xff]
    %v26 = vld [vmem:[%s1 + $0x38] sm:$0xff]
    %v27 = vld [vmem:[%s2] sm:$0x1]
    %v29 = vlaneseq
    %v30 = vshrl.u32 %v29, 7
    %v31 = vsub.s32 0, %v30
    %v32 = vrot.slane %v27, %v31
    %vm34 = vcmask 523264
    %v36 = vsel %vm34, %v15, 0
    %v39 = vsel %vm34, %v16, 0
    %v42 = vsel %vm34, %v17, 0
    %v45 = vsel %vm34, %v18, 0
    %47 = vmatprep.subr.mxu0 0.0
    %48 = vmatpush1.msra.mxu0 %v19
    %49 = vmatprep.subr.mxu0 0.0
    %50 = vmatpush1.msra.mxu0 %v20
    %51 = vmatprep.subr.mxu0 0.0
    %52 = vmatpush1.msra.mxu0 %v21
    %53 = vmatprep.subr.mxu0 0.0
    %54 = vmatpush1.msra.mxu0 %v22
    %55 = vmatprep.subr.mxu0 0.0
    %56 = vmatpush1.msra.mxu0 %v23
    %57 = vmatprep.subr.mxu0 0.0
    %58 = vmatpush1.msra.mxu0 %v24
    %59 = vmatprep.subr.mxu0 0.0
    %60 = vmatpush1.msra.mxu0 %v25
    %61 = vmatprep.subr.mxu0 0.0
    %62 = vmatpush1.msra.mxu0 %v26
    %63 = vmatprep.subr.mxu0 0.0
    %64 = vmatpush1.msra.mxu0 0.0
    %65 = vmatprep.subr.mxu0 0.0
    %66 = vmatpush1.msra.mxu0 0.0
    %67 = vmatprep.subr.mxu0 0.0
    %68 = vmatpush1.msra.mxu0 0.0
    %69 = vmatprep.subr.mxu0 0.0
    %70 = vmatpush1.msra.mxu0 0.0
    %71 = vmatprep.subr.mxu0 0.0
    %72 = vmatpush1.msra.mxu0 0.0
    %73 = vmatprep.subr.mxu0 0.0
    %74 = vmatpush1.msra.mxu0 0.0
    %75 = vmatprep.subr.mxu0 0.0
    %76 = vmatpush1.msra.mxu0 0.0
    %77 = vmatprep.subr.mxu0 0.0
    %78 = vmatpush1.msra.mxu0 0.0
    %79 = vmatprep.subr.mxu0 0.0
    %80 = vmatpush1.msra.mxu0 0.0
    %81 = vmatprep.subr.mxu0 0.0
    %82 = vmatpush1.msra.mxu0 0.0
    %83 = vmatprep.subr.mxu0 0.0
    %84 = vmatpush1.msra.mxu0 0.0
    %85 = vmatprep.subr.mxu0 0.0
    %86 = vmatpush1.msra.mxu0 0.0
    %87 = vmatprep.subr.mxu0 0.0
    %88 = vmatpush1.msra.mxu0 0.0
    %89 = vmatprep.subr.mxu0 0.0
    %90 = vmatpush1.msra.mxu0 0.0
    %91 = vmatprep.subr.mxu0 0.0
    %92 = vmatpush1.msra.mxu0 0.0
    %93 = vmatprep.subr.mxu0 0.0
    %94 = vmatpush1.msra.mxu0 0.0
    %95 = vmatprep.subr.mxu0 0.0
    %96 = vmatpush1.msra.mxu0 0.0
    %97 = vmatprep.subr.mxu0 0.0
    %98 = vmatpush1.msra.mxu0 0.0
    %99 = vmatprep.subr.mxu0 0.0
    %100 = vmatpush1.msra.mxu0 0.0
    %101 = vmatprep.subr.mxu0 0.0
    %102 = vmatpush1.msra.mxu0 0.0
    %103 = vmatprep.subr.mxu0 0.0
    %104 = vmatpush1.msra.mxu0 0.0
    %105 = vmatprep.subr.mxu0 0.0
    %106 = vmatpush1.msra.mxu0 0.0
    %107 = vmatprep.subr.mxu0 0.0
    %108 = vmatpush1.msra.mxu0 0.0
    %109 = vmatprep.subr.mxu0 0.0
    %110 = vmatpush1.msra.mxu0 0.0
    %111 = vmatprep.mubr.f32.mxu0 0.0
    %112 = vmatmul.mubr.f32.gmra.mrb[0].mxu0 %v36
    %v113 = vpop.f32.mrb[0].mxu0
    %v114 = vadd.f32 %v32, %v113
    %v115 = vpop.f32.mrb[0].mxu0
    %116 = vmatprep.mubr.f32.mxu0 0.0
    %117 = vmatmul.mubr.f32.gmra.mrb[0].mxu0 %v39
    %v118 = vpop.f32.mrb[0].mxu0
    %v119 = vadd.f32 %v32, %v118
    %v120 = vpop.f32.mrb[0].mxu0
    %121 = vmatprep.mubr.f32.mxu0 0.0
    %122 = vmatmul.mubr.f32.gmra.mrb[0].mxu0 %v42
    %v123 = vpop.f32.mrb[0].mxu0
    %v124 = vadd.f32 %v32, %v123
    %v125 = vpop.f32.mrb[0].mxu0
    %126 = vmatprep.mubr.f32.mxu0 0.0
    %127 = vmatmul.mubr.f32.gmra.mrb[0].mxu0 %v45
    %v128 = vpop.f32.mrb[0].mxu0
    %v129 = vadd.f32 %v32, %v128
    %v130 = vpop.f32.mrb[0].mxu0
    %131 = vdwg.mxu0
    %132 = vst.msk [vmem:[#allocation2] sm:$0xff] %vm34, %v114
    %133 = vst.msk [vmem:[#allocation2 + $0x8] sm:$0xff] %vm34, %v119
    %134 = vst.msk [vmem:[#allocation2 + $0x10] sm:$0xff] %vm34, %v124
    %135 = vst.msk [vmem:[#allocation2 + $0x18] sm:$0xff] %vm34, %v129
    // Predicated region
    $region14: #{multi_head_attention_module.5} parent=1 // pred_check
      _
    $region15: #{multi_head_attention_module.5} parent=1 // pred_check_branch
      %137 = sbr.rel (0) target = $region17
    $region16: #{multi_head_attention_module.5} parent=1 // pred_region
      %s139 = ssub.s32 512, 512
      %140 = vsyncadd [#allocation3], %s139
      %s141 = sshll.u32 [#allocation2], 4
      %s142 = int_to_ptr.vmem [resolvable:$true] %s141
      %147 = dma.vmem_to_hbm [thread:$0]  %s142, 512, %s3, [#allocation3], 128, 128, 8
    $region17: #{multi_head_attention_module.5} parent=1 // pred_fallthru
      _
    // Predicated region
    $region18: #{multi_head_attention_module.5} parent=1 // pred_check
      _
    $region19: #{multi_head_attention_module.5} parent=1 // pred_check_branch
      %149 = sbr.rel (0) target = $region21
    $region20: #{multi_head_attention_module.5} parent=1 // pred_region
      %150 = dma.done [#allocation3], 512
    $region21: #{multi_head_attention_module.5} parent=1 // pred_fallthru
      _
    %151 = vsyncpa [#allocation3], 1

// kernel: multi_head_attention_module.3
$region0: #{multi_head_attention_module.3}
  #allocation0 [shape = 'u32[]', space=smem, size = 0x4, offset = 0x4, fixed_abs, tag = 'smem constant byte address 0x4 - core index']
  #allocation1 [shape = 'u32[144,128]{1,0:T(1,128)}', space=vmem, size = 0x12000, scoped, tag = 'internal scratch']
  %s0 = inlined_call_operand.vmem [shape: f32[2,16,64], index: 0, kind: input, shape index: {}]
  %s1 = inlined_call_operand.vmem [shape: f32[1,64], index: 1, kind: input, shape index: {}]
  %s2 = inlined_call_operand.vmem [shape: f32[1,64], index: 2, kind: input, shape index: {}]
  %s3 = inlined_call_operand.vmem [shape: f32[64,320], index: 3, kind: input, shape index: {}]
  %s4 = inlined_call_operand.vmem [shape: f32[1,320], index: 4, kind: input, shape index: {}]
  %s5 = inlined_call_operand.vmem [shape: f32[16,64], index: 5, kind: input, shape index: {}]
  %s6 = inlined_call_operand.vmem [shape: f32[16,64], index: 6, kind: input, shape index: {}]
  %s7 = inlined_call_operand.vmem [shape: f32[2,16,64], index: 7, kind: output, shape index: {0}]
  %s8 = inlined_call_operand.vmem [shape: f32[2,16,64], index: 8, kind: output, shape index: {1}]
  %s9 = inlined_call_operand.vmem [shape: f32[2,16,64], index: 9, kind: output, shape index: {2}]
  %10 = xla_tuple %s7, %s8, %s9
  %s11 = sld [smem:[#allocation0]]
  $region77: #{multi_head_attention_module.3} parent=0
    _
  %s13 = ssub.s32 1, %s11
  %s14 = scalar_select 0, %s13, %s11
  loop: start=0, step=1, limit=4
  $region2: #{multi_head_attention_module.3} parent=0 // loop_pre_header
    _
  $region3: #{multi_head_attention_module.3} parent=0 // loop_header
    %s16 = sphi 0, %s20
    %p17 = scmp.ge.s32.totalorder %s16, 4
    %s23 = sphi 0, %s35
    %s24 = sphi 0, %s31
    %s25 = sphi 0, %s23
    %s26 = sphi 0, %s24
    %s27 = sphi 0, %s25
    %s28 = sphi 0, %s26
    %s40 = sphi 0, %s42
    %s43 = sphi 0, %s40
    %s44 = sphi 0, %s43
    %s60 = sphi 0, %s44
    %s64 = sphi 0, %s64
    %s66 = sphi 0, %s64
    %s67 = sphi 0, %s66
    %s81 = sphi 0, %s67
    %s85 = sphi 0, %s85
    %s87 = sphi 0, %s85
    %s88 = sphi 0, %s87
    %s102 = sphi 0, %s88
    %s106 = sphi 0, %s106
    %s108 = sphi 0, %s106
    %s109 = sphi 0, %s108
    %s123 = sphi 0, %s109
    %s127 = sphi 0, %s127
    %s129 = sphi 0, %s127
    %s130 = sphi 0, %s129
    %s144 = sphi 0, %s130
    %s150 = sphi 0, %s152
    %s153 = sphi 0, %s150
    %s154 = sphi 0, %s153
    %s170 = sphi 0, %s154
    %s176 = sphi 0, %s178
    %s179 = sphi 0, %s176
    %s180 = sphi 0, %s179
    %s196 = sphi 0, %s180
    %s204 = sphi 0, %s206
    %s207 = sphi 0, %s204
    %s208 = sphi 0, %s207
    %s224 = sphi 0, %s208
    %s232 = sphi 0, %s234
    %s235 = sphi 0, %s232
    %s236 = sphi 0, %s235
    %s252 = sphi 0, %s236
    %s260 = sphi 0, %s262
    %s263 = sphi 0, %s260
    %s264 = sphi 0, %s263
    %s280 = sphi 0, %s264
  $region4: #{multi_head_attention_module.3} parent=0 // loop_header_branch
    %19 = sbr.rel (%p17) target = $region8
  $region5: #{multi_head_attention_module.3} parent=0 // loop_body
    %s21 = ssub.s32 %s16, 1
    %s22 = ssub.s32 %s16, 2
    %s29 = sadd.s32 1, %s24
    %p30 = scmp.ge.s32.totalorder %s29, 1
    %s31 = scalar_select %p30, 0, %s29
    %s32 = sadd.s32 1, %s23
    %s33 = scalar_select %p30, %s32, %s23
    %p34 = scmp.ge.s32.totalorder %s33, 2
    %s35 = scalar_select %p34, 0, %s33
    %s36 = ssub.s32 %s23, %s35
    %s37 = ssub.s32 %s24, %s31
    %s38 = sor.u32 %s36, %s37
    %p39 = scmp.eq.s32.totalorder %s38, 0
    %s41 = sadd.s32 %s40, 1
    %s42 = scalar_select %p39, %s40, %s41
    %p45 = pneg %p39
    %p46 = scmp.eq.s32.totalorder %s16, 1
    %p47 = por %p45, %p46
    %p48 = scmp.ne.s32.totalorder %s40, %s43
    %p49 = scmp.eq.s32.totalorder %s16, 0
    %p50 = por %p48, %p49
    %p51 = scmp.ne.s32.totalorder %s40, %s43
    %p52 = scmp.eq.s32.totalorder %s21, 1
    %p53 = por %p51, %p52
    %p54 = scmp.ne.s32.totalorder %s43, %s44
    %p55 = scmp.eq.s32.totalorder %s21, 0
    %p56 = por %p54, %p55
    %p57 = scmp.ne.s32.totalorder %s43, %s44
    %p58 = scmp.eq.s32.totalorder %s22, 1
    %p59 = por %p57, %p58
    %p61 = scmp.ne.s32.totalorder %s44, %s60
    %p62 = scmp.eq.s32.totalorder %s22, 0
    %p63 = por %p61, %p62
    %s65 = sadd.s32 %s64, 1
    %p68 = scmp.eq.s32.totalorder %s16, 1
    %p69 = scmp.ne.s32.totalorder %s64, %s66
    %p70 = scmp.eq.s32.totalorder %s16, 0
    %p71 = por %p69, %p70
    %p72 = scmp.ne.s32.totalorder %s64, %s66
    %p73 = scmp.eq.s32.totalorder %s21, 1
    %p74 = por %p72, %p73
    %p75 = scmp.ne.s32.totalorder %s66, %s67
    %p76 = scmp.eq.s32.totalorder %s21, 0
    %p77 = por %p75, %p76
    %p78 = scmp.ne.s32.totalorder %s66, %s67
    %p79 = scmp.eq.s32.totalorder %s22, 1
    %p80 = por %p78, %p79
    %p82 = scmp.ne.s32.totalorder %s67, %s81
    %p83 = scmp.eq.s32.totalorder %s22, 0
    %p84 = por %p82, %p83
    %s86 = sadd.s32 %s85, 1
    %p89 = scmp.eq.s32.totalorder %s16, 1
    %p90 = scmp.ne.s32.totalorder %s85, %s87
    %p91 = scmp.eq.s32.totalorder %s16, 0
    %p92 = por %p90, %p91
    %p93 = scmp.ne.s32.totalorder %s85, %s87
    %p94 = scmp.eq.s32.totalorder %s21, 1
    %p95 = por %p93, %p94
    %p96 = scmp.ne.s32.totalorder %s87, %s88
    %p97 = scmp.eq.s32.totalorder %s21, 0
    %p98 = por %p96, %p97
    %p99 = scmp.ne.s32.totalorder %s87, %s88
    %p100 = scmp.eq.s32.totalorder %s22, 1
    %p101 = por %p99, %p100
    %p103 = scmp.ne.s32.totalorder %s88, %s102
    %p104 = scmp.eq.s32.totalorder %s22, 0
    %p105 = por %p103, %p104
    %s107 = sadd.s32 %s106, 1
    %p110 = scmp.eq.s32.totalorder %s16, 1
    %p111 = scmp.ne.s32.totalorder %s106, %s108
    %p112 = scmp.eq.s32.totalorder %s16, 0
    %p113 = por %p111, %p112
    %p114 = scmp.ne.s32.totalorder %s106, %s108
    %p115 = scmp.eq.s32.totalorder %s21, 1
    %p116 = por %p114, %p115
    %p117 = scmp.ne.s32.totalorder %s108, %s109
    %p118 = scmp.eq.s32.totalorder %s21, 0
    %p119 = por %p117, %p118
    %p120 = scmp.ne.s32.totalorder %s108, %s109
    %p121 = scmp.eq.s32.totalorder %s22, 1
    %p122 = por %p120, %p121
    %p124 = scmp.ne.s32.totalorder %s109, %s123
    %p125 = scmp.eq.s32.totalorder %s22, 0
    %p126 = por %p124, %p125
    %s128 = sadd.s32 %s127, 1
    %p131 = scmp.eq.s32.totalorder %s16, 1
    %p132 = scmp.ne.s32.totalorder %s127, %s129
    %p133 = scmp.eq.s32.totalorder %s16, 0
    %p134 = por %p132, %p133
    %p135 = scmp.ne.s32.totalorder %s127, %s129
    %p136 = scmp.eq.s32.totalorder %s21, 1
    %p137 = por %p135, %p136
    %p138 = scmp.ne.s32.totalorder %s129, %s130
    %p139 = scmp.eq.s32.totalorder %s21, 0
    %p140 = por %p138, %p139
    %p141 = scmp.ne.s32.totalorder %s129, %s130
    %p142 = scmp.eq.s32.totalorder %s22, 1
    %p143 = por %p141, %p142
    %p145 = scmp.ne.s32.totalorder %s130, %s144
    %p146 = scmp.eq.s32.totalorder %s22, 0
    %p147 = por %p145, %p146
    %s148 = ssub.s32 %s24, %s31
    %p149 = scmp.eq.s32.totalorder %s148, 0
    %s151 = sadd.s32 %s150, 1
    %s152 = scalar_select %p149, %s150, %s151
    %p155 = pneg %p149
    %p156 = scmp.eq.s32.totalorder %s16, 1
    %p157 = por %p155, %p156
    %p158 = scmp.ne.s32.totalorder %s150, %s153
    %p159 = scmp.eq.s32.totalorder %s16, 0
    %p160 = por %p158, %p159
    %p161 = scmp.ne.s32.totalorder %s150, %s153
    %p162 = scmp.eq.s32.totalorder %s21, 1
    %p163 = por %p161, %p162
    %p164 = scmp.ne.s32.totalorder %s153, %s154
    %p165 = scmp.eq.s32.totalorder %s21, 0
    %p166 = por %p164, %p165
    %p167 = scmp.ne.s32.totalorder %s153, %s154
    %p168 = scmp.eq.s32.totalorder %s22, 1
    %p169 = por %p167, %p168
    %p171 = scmp.ne.s32.totalorder %s154, %s170
    %p172 = scmp.eq.s32.totalorder %s22, 0
    %p173 = por %p171, %p172
    %s174 = ssub.s32 %s24, %s31
    %p175 = scmp.eq.s32.totalorder %s174, 0
    %s177 = sadd.s32 %s176, 1
    %s178 = scalar_select %p175, %s176, %s177
    %p181 = pneg %p175
    %p182 = scmp.eq.s32.totalorder %s16, 1
    %p183 = por %p181, %p182
    %p184 = scmp.ne.s32.totalorder %s176, %s179
    %p185 = scmp.eq.s32.totalorder %s16, 0
    %p186 = por %p184, %p185
    %p187 = scmp.ne.s32.totalorder %s176, %s179
    %p188 = scmp.eq.s32.totalorder %s21, 1
    %p189 = por %p187, %p188
    %p190 = scmp.ne.s32.totalorder %s179, %s180
    %p191 = scmp.eq.s32.totalorder %s21, 0
    %p192 = por %p190, %p191
    %p193 = scmp.ne.s32.totalorder %s179, %s180
    %p194 = scmp.eq.s32.totalorder %s22, 1
    %p195 = por %p193, %p194
    %p197 = scmp.ne.s32.totalorder %s180, %s196
    %p198 = scmp.eq.s32.totalorder %s22, 0
    %p199 = por %p197, %p198
    %s200 = ssub.s32 %s23, %s35
    %s201 = ssub.s32 %s24, %s31
    %s202 = sor.u32 %s200, %s201
    %p203 = scmp.eq.s32.totalorder %s202, 0
    %s205 = sadd.s32 %s204, 1
    %s206 = scalar_select %p203, %s204, %s205
    %p209 = pneg %p203
    %p210 = scmp.eq.s32.totalorder %s16, 1
    %p211 = por %p209, %p210
    %p212 = scmp.ne.s32.totalorder %s204, %s207
    %p213 = scmp.eq.s32.totalorder %s16, 0
    %p214 = por %p212, %p213
    %p215 = scmp.ne.s32.totalorder %s204, %s207
    %p216 = scmp.eq.s32.totalorder %s21, 1
    %p217 = por %p215, %p216
    %p218 = scmp.ne.s32.totalorder %s207, %s208
    %p219 = scmp.eq.s32.totalorder %s21, 0
    %p220 = por %p218, %p219
    %p221 = scmp.ne.s32.totalorder %s207, %s208
    %p222 = scmp.eq.s32.totalorder %s22, 1
    %p223 = por %p221, %p222
    %p225 = scmp.ne.s32.totalorder %s208, %s224
    %p226 = scmp.eq.s32.totalorder %s22, 0
    %p227 = por %p225, %p226
    %s228 = ssub.s32 %s23, %s35
    %s229 = ssub.s32 %s24, %s31
    %s230 = sor.u32 %s228, %s229
    %p231 = scmp.eq.s32.totalorder %s230, 0
    %s233 = sadd.s32 %s232, 1
    %s234 = scalar_select %p231, %s232, %s233
    %p237 = pneg %p231
    %p238 = scmp.eq.s32.totalorder %s16, 1
    %p239 = por %p237, %p238
    %p240 = scmp.ne.s32.totalorder %s232, %s235
    %p241 = scmp.eq.s32.totalorder %s16, 0
    %p242 = por %p240, %p241
    %p243 = scmp.ne.s32.totalorder %s232, %s235
    %p244 = scmp.eq.s32.totalorder %s21, 1
    %p245 = por %p243, %p244
    %p246 = scmp.ne.s32.totalorder %s235, %s236
    %p247 = scmp.eq.s32.totalorder %s21, 0
    %p248 = por %p246, %p247
    %p249 = scmp.ne.s32.totalorder %s235, %s236
    %p250 = scmp.eq.s32.totalorder %s22, 1
    %p251 = por %p249, %p250
    %p253 = scmp.ne.s32.totalorder %s236, %s252
    %p254 = scmp.eq.s32.totalorder %s22, 0
    %p255 = por %p253, %p254
    %s256 = ssub.s32 %s23, %s35
    %s257 = ssub.s32 %s24, %s31
    %s258 = sor.u32 %s256, %s257
    %p259 = scmp.eq.s32.totalorder %s258, 0
    %s261 = sadd.s32 %s260, 1
    %s262 = scalar_select %p259, %s260, %s261
    %p265 = pneg %p259
    %p266 = scmp.eq.s32.totalorder %s16, 1
    %p267 = por %p265, %p266
    %p268 = scmp.ne.s32.totalorder %s260, %s263
    %p269 = scmp.eq.s32.totalorder %s16, 0
    %p270 = por %p268, %p269
    %p271 = scmp.ne.s32.totalorder %s260, %s263
    %p272 = scmp.eq.s32.totalorder %s21, 1
    %p273 = por %p271, %p272
    %p274 = scmp.ne.s32.totalorder %s263, %s264
    %p275 = scmp.eq.s32.totalorder %s21, 0
    %p276 = por %p274, %p275
    %p277 = scmp.ne.s32.totalorder %s263, %s264
    %p278 = scmp.eq.s32.totalorder %s22, 1
    %p279 = por %p277, %p278
    %p281 = scmp.ne.s32.totalorder %s264, %s280
    %p282 = scmp.eq.s32.totalorder %s22, 0
    %p283 = por %p281, %p282
    %p284 = scmp.le.s32.totalorder 1, %s16
    %p285 = scmp.lt.s32.totalorder %s16, 3
    %p286 = pnand %p284, %p285
    %p287 = pneg %p286
    // Predicated region
    $region9: #{multi_head_attention_module.3} parent=5 // pred_check
      _
    $region10: #{multi_head_attention_module.3} parent=5 // pred_check_branch
      %289 = sbr.rel (%p286) target = $region12
    $region11: #{multi_head_attention_module.3} parent=5 // pred_region
      %s290 = ssub.s32 %s16, 1
      // Predicated region
      $region13: #{multi_head_attention_module.3} parent=11 // pred_check
        %p291 = pneg %p77
      $region14: #{multi_head_attention_module.3} parent=11 // pred_check_branch
        %293 = sbr.rel (%p291) target = $region16
      $region15: #{multi_head_attention_module.3} parent=11 // pred_region
        _
      $region16: #{multi_head_attention_module.3} parent=11 // pred_fallthru
        _
      // Predicated region
      $region17: #{multi_head_attention_module.3} parent=11 // pred_check
        %p294 = pneg %p98
      $region18: #{multi_head_attention_module.3} parent=11 // pred_check_branch
        %296 = sbr.rel (%p294) target = $region20
      $region19: #{multi_head_attention_module.3} parent=11 // pred_region
        _
      $region20: #{multi_head_attention_module.3} parent=11 // pred_fallthru
        _
      // Predicated region
      $region21: #{multi_head_attention_module.3} parent=11 // pred_check
        %p297 = pneg %p119
      $region22: #{multi_head_attention_module.3} parent=11 // pred_check_branch
        %299 = sbr.rel (%p297) target = $region24
      $region23: #{multi_head_attention_module.3} parent=11 // pred_region
        _
      $region24: #{multi_head_attention_module.3} parent=11 // pred_fallthru
        _
      // Predicated region
      $region25: #{multi_head_attention_module.3} parent=11 // pred_check
        %p300 = pneg %p140
      $region26: #{multi_head_attention_module.3} parent=11 // pred_check_branch
        %302 = sbr.rel (%p300) target = $region28
      $region27: #{multi_head_attention_module.3} parent=11 // pred_region
        _
      $region28: #{multi_head_attention_module.3} parent=11 // pred_fallthru
        _
      // Predicated region
      $region29: #{multi_head_attention_module.3} parent=11 // pred_check
        %p303 = pneg %p166
      $region30: #{multi_head_attention_module.3} parent=11 // pred_check_branch
        %305 = sbr.rel (%p303) target = $region32
      $region31: #{multi_head_attention_module.3} parent=11 // pred_region
        %s306 = smul.u32 2, %s26
        %p307 = scmp.lt.s32.totalorder %s306, 1
        %s308 = scalar_select %p307, %s306, 1
        %s309 = smul.addr %s308, 8
        %s310 = scalar_lea.vmem %s5, %s309
        %s311 = smul.u32 2, %s26
      $region32: #{multi_head_attention_module.3} parent=11 // pred_fallthru
        _
      // Predicated region
      $region33: #{multi_head_attention_module.3} parent=11 // pred_check
        %p312 = pneg %p192
      $region34: #{multi_head_attention_module.3} parent=11 // pred_check_branch
        %314 = sbr.rel (%p312) target = $region36
      $region35: #{multi_head_attention_module.3} parent=11 // pred_region
        %s315 = smul.u32 2, %s26
        %p316 = scmp.lt.s32.totalorder %s315, 1
        %s317 = scalar_select %p316, %s315, 1
        %s318 = smul.addr %s317, 8
        %s319 = scalar_lea.vmem %s6, %s318
        %s320 = smul.u32 2, %s26
      $region36: #{multi_head_attention_module.3} parent=11 // pred_fallthru
        _
    $region12: #{multi_head_attention_module.3} parent=5 // pred_fallthru
      _
    %p321 = scmp.lt.s32.totalorder %s16, 2
    // Predicated region
    $region37: #{multi_head_attention_module.3} parent=5 // pred_check
      %p322 = pneg %p321
    $region38: #{multi_head_attention_module.3} parent=5 // pred_check_branch
      %324 = sbr.rel (%p322) target = $region40
    $region39: #{multi_head_attention_module.3} parent=5 // pred_region
      // Predicated region
      $region41: #{multi_head_attention_module.3} parent=39 // pred_check
        %p325 = pneg %p50
      $region42: #{multi_head_attention_module.3} parent=39 // pred_check_branch
        %327 = sbr.rel (%p325) target = $region44
      $region43: #{multi_head_attention_module.3} parent=39 // pred_region
        %s328 = smul.u32 2, %s24
        %p329 = scmp.lt.s32.totalorder %s23, 1
        %s330 = scalar_select %p329, %s23, 1
        %p331 = scmp.lt.s32.totalorder %s328, 1
        %s332 = scalar_select %p331, %s328, 1
        %s333 = smul.addr %s330, 2
        %s334 = sadd.s32 %s332, %s333
        %s335 = smul.addr %s334, 8
        %s336 = scalar_lea.vmem %s0, %s335
        %s337 = smul.u32 2, %s24
      $region44: #{multi_head_attention_module.3} parent=39 // pred_fallthru
        _
    $region40: #{multi_head_attention_module.3} parent=5 // pred_fallthru
      _
    %p338 = scmp.le.s32.totalorder 1, %s16
    %p339 = scmp.lt.s32.totalorder %s16, 3
    %p340 = pnand %p338, %p339
    %p341 = pneg %p340
    // Predicated region
    $region45: #{multi_head_attention_module.3} parent=5 // pred_check
      _
    $region46: #{multi_head_attention_module.3} parent=5 // pred_check_branch
      %343 = sbr.rel (%p340) target = $region48
    $region47: #{multi_head_attention_module.3} parent=5 // pred_region
      %s344 = ssub.s32 %s16, 1
      %s345 = smul.u32 2, %s26
      %p346 = scmp.lt.s32.totalorder %s25, 1
      %s347 = scalar_select %p346, %s25, 1
      %p348 = scmp.lt.s32.totalorder %s345, 1
      %s349 = scalar_select %p348, %s345, 1
      %s350 = smul.addr %s347, 2
      %s351 = sadd.s32 %s349, %s350
      %s352 = smul.addr %s351, 8
      %s353 = scalar_lea.vmem %s0, %s352
      %p354 = pneg %p56
      %p355 = pneg %p53
      %p356 = pneg %p77
      %p357 = pneg %p74
      %p358 = pneg %p98
      %p359 = pneg %p95
      %p360 = pneg %p119
      %p361 = pneg %p116
      %p362 = pneg %p140
      %p363 = pneg %p137
      %s364 = smul.u32 2, %s26
      %p365 = scmp.lt.s32.totalorder %s364, 1
      %s366 = scalar_select %p365, %s364, 1
      %s367 = smul.addr %s366, 8
      %s368 = scalar_lea.vmem %s5, %s367
      %p369 = pneg %p166
      %p370 = pneg %p163
      %s371 = smul.u32 2, %s26
      %p372 = scmp.lt.s32.totalorder %s371, 1
      %s373 = scalar_select %p372, %s371, 1
      %s374 = smul.addr %s373, 8
      %s375 = scalar_lea.vmem %s6, %s374
      %p376 = pneg %p192
      %p377 = pneg %p189
      %p378 = pneg %p220
      %p379 = pneg %p217
      %s380 = smul.u32 2, %s26
      %p381 = scmp.lt.s32.totalorder %s25, 1
      %s382 = scalar_select %p381, %s25, 1
      %p383 = scmp.lt.s32.totalorder %s380, 1
      %s384 = scalar_select %p383, %s380, 1
      %s385 = smul.addr %s382, 2
      %s386 = sadd.s32 %s384, %s385
      %s387 = smul.addr %s386, 8
      %s388 = scalar_lea.vmem %s7, %s387
      %p389 = pneg %p248
      %p390 = pneg %p245
      %s391 = smul.u32 2, %s26
      %p392 = scmp.lt.s32.totalorder %s25, 1
      %s393 = scalar_select %p392, %s25, 1
      %p394 = scmp.lt.s32.totalorder %s391, 1
      %s395 = scalar_select %p394, %s391, 1
      %s396 = smul.addr %s393, 2
      %s397 = sadd.s32 %s395, %s396
      %s398 = smul.addr %s397, 8
      %s399 = scalar_lea.vmem %s8, %s398
      %p400 = pneg %p276
      %p401 = pneg %p273
      %s402 = smul.u32 2, %s26
      %p403 = scmp.lt.s32.totalorder %s25, 1
      %s404 = scalar_select %p403, %s25, 1
      %p405 = scmp.lt.s32.totalorder %s402, 1
      %s406 = scalar_select %p405, %s402, 1
      %s407 = smul.addr %s404, 2
      %s408 = sadd.s32 %s406, %s407
      %s409 = smul.addr %s408, 8
      %s410 = scalar_lea.vmem %s9, %s409
      %s411 = smul.u32 2, %s26
      %p412 = scmp.lt.s32.totalorder %s25, 1
      %s413 = scalar_select %p412, %s25, 1
      %p414 = scmp.lt.s32.totalorder %s411, 1
      %s415 = scalar_select %p414, %s411, 1
      %s416 = smul.addr %s413, 2
      %s417 = sadd.s32 %s415, %s416
      %s418 = smul.addr %s417, 8
      %s419 = scalar_lea.vmem %s0, %s418
      %s420 = smul.u32 2, %s26
      %s421 = smul.u32 2, %s26
      %p422 = scmp.lt.s32.totalorder %s421, 1
      %s423 = scalar_select %p422, %s421, 1
      %s424 = smul.addr %s423, 8
      %s425 = scalar_lea.vmem %s5, %s424
      %s426 = smul.u32 2, %s26
      %s427 = smul.u32 2, %s26
      %p428 = scmp.lt.s32.totalorder %s427, 1
      %s429 = scalar_select %p428, %s427, 1
      %s430 = smul.addr %s429, 8
      %s431 = scalar_lea.vmem %s6, %s430
      %s432 = smul.u32 2, %s26
      %s433 = smul.u32 2, %s26
      %p434 = scmp.lt.s32.totalorder %s25, 1
      %s435 = scalar_select %p434, %s25, 1
      %p436 = scmp.lt.s32.totalorder %s433, 1
      %s437 = scalar_select %p436, %s433, 1
      %s438 = smul.addr %s435, 2
      %s439 = sadd.s32 %s437, %s438
      %s440 = smul.addr %s439, 8
      %s441 = scalar_lea.vmem %s7, %s440
      %s442 = smul.u32 2, %s26
      %s443 = smul.u32 2, %s26
      %p444 = scmp.lt.s32.totalorder %s25, 1
      %s445 = scalar_select %p444, %s25, 1
      %p446 = scmp.lt.s32.totalorder %s443, 1
      %s447 = scalar_select %p446, %s443, 1
      %s448 = smul.addr %s445, 2
      %s449 = sadd.s32 %s447, %s448
      %s450 = smul.addr %s449, 8
      %s451 = scalar_lea.vmem %s8, %s450
      %s452 = smul.u32 2, %s26
      %s453 = smul.u32 2, %s26
      %p454 = scmp.lt.s32.totalorder %s25, 1
      %s455 = scalar_select %p454, %s25, 1
      %p456 = scmp.lt.s32.totalorder %s453, 1
      %s457 = scalar_select %p456, %s453, 1
      %s458 = smul.addr %s455, 2
      %s459 = sadd.s32 %s457, %s458
      %s460 = smul.addr %s459, 8
      %s461 = scalar_lea.vmem %s9, %s460
      %s462 = smul.u32 2, %s26
      %v463 = vld [vmem:[%s419] sm:$0xff]
      %v464 = vld [vmem:[%s419 + $0x8] sm:$0xff]
      %vm465 = vcmask 523264
      %v466 = vsel %vm465, %v463, 0.0
      %467 = vadd.xlane.f32.xlu0 %v466
      %v468 = vpop.xlane.xlu0 %467
      %v469 = vsel %vm465, %v464, 0.0
      %470 = vadd.xlane.f32.xlu0 %v469
      %v471 = vpop.xlane.xlu0 %470
      %v472 = vrcp.pop 64.0
      %v473 = vmul.f32 %v468, %v472
      %v474 = vmul.f32 %v471, %v472
      %v475 = vsub.f32 %v463, %v473
      %v476 = vsub.f32 %v464, %v474
      %v477 = vmul.f32 %v475, %v475
      %v478 = vmul.f32 %v476, %v476
      %v479 = vsel %vm465, %v477, 0.0
      %480 = vadd.xlane.f32.xlu0 %v479
      %v481 = vpop.xlane.xlu0 %480
      %v482 = vsel %vm465, %v478, 0.0
      %483 = vadd.xlane.f32.xlu0 %v482
      %v484 = vpop.xlane.xlu0 %483
      %v485 = vmul.f32 %v481, %v472
      %v486 = vmul.f32 %v484, %v472
      %v487 = vadd.f32 %v485, 1e-05
      %v488 = vadd.f32 %v486, 1e-05
      %v489 = vrsqrt.pop %v487
      %v490 = vrsqrt.pop %v488
      %v491 = vmul.f32 %v475, %v489
      %v492 = vmul.f32 %v476, %v490
      %v493 = vld [vmem:[%s1] sm:$0x1]
      %v495 = vlaneseq
      %v496 = vshrl.u32 %v495, 7
      %v497 = vsub.s32 0, %v496
      %v498 = vrot.slane %v493, %v497
      %v500 = vmul.f32 %v491, %v498
      %v501 = vmul.f32 %v492, %v498
      %v502 = vld [vmem:[%s2] sm:$0x1]
      %v504 = vlaneseq
      %v505 = vshrl.u32 %v504, 7
      %v506 = vsub.s32 0, %v505
      %v507 = vrot.slane %v502, %v506
      %v509 = vadd.f32 %v500, %v507
      %v510 = vadd.f32 %v501, %v507
      %v511 = vld [vmem:[%s3] sm:$0xff]
      %v512 = vld [vmem:[%s3 + $0x8] sm:$0xff]
      %v513 = vld [vmem:[%s3 + $0x10] sm:$0xff]
      %v514 = vld [vmem:[%s3 + $0x18] sm:$0xff]
      %v515 = vld [vmem:[%s3 + $0x20] sm:$0xff]
      %v516 = vld [vmem:[%s3 + $0x28] sm:$0xff]
      %v517 = vld [vmem:[%s3 + $0x30] sm:$0xff]
      %v518 = vld [vmem:[%s3 + $0x38] sm:$0xff]
      %v519 = vld [vmem:[%s3 + $0x40] sm:$0xff]
      %v520 = vld [vmem:[%s3 + $0x48] sm:$0xff]
      %v521 = vld [vmem:[%s3 + $0x50] sm:$0xff]
      %v522 = vld [vmem:[%s3 + $0x58] sm:$0xff]
      %v523 = vld [vmem:[%s3 + $0x60] sm:$0xff]
      %v524 = vld [vmem:[%s3 + $0x68] sm:$0xff]
      %v525 = vld [vmem:[%s3 + $0x70] sm:$0xff]
      %v526 = vld [vmem:[%s3 + $0x78] sm:$0xff]
      %v527 = vld [vmem:[%s3 + $0x80] sm:$0xff]
      %v528 = vld [vmem:[%s3 + $0x88] sm:$0xff]
      %v529 = vld [vmem:[%s3 + $0x90] sm:$0xff]
      %v530 = vld [vmem:[%s3 + $0x98] sm:$0xff]
      %v531 = vld [vmem:[%s3 + $0xa0] sm:$0xff]
      %v532 = vld [vmem:[%s3 + $0xa8] sm:$0xff]
      %v533 = vld [vmem:[%s3 + $0xb0] sm:$0xff]
      %v534 = vld [vmem:[%s3 + $0xb8] sm:$0xff]
      %v535 = vld [vmem:[%s4] sm:$0x7]
      %v537 = vlaneseq
      %v538 = vshrl.u32 %v537, 7
      %v539 = vsub.s32 0, %v538
      %v540 = vrot.slane %v535, %v539
      %v541 = vlaneseq
      %v542 = vshrl.u32 %v541, 7
      %v543 = vsub.s32 1, %v542
      %v544 = vrot.slane %v535, %v543
      %v545 = vlaneseq
      %v546 = vshrl.u32 %v545, 7
      %v547 = vsub.s32 2, %v546
      %v548 = vrot.slane %v535, %v547
      %v553 = vsel %vm465, %v509, 0
      %v556 = vsel %vm465, %v510, 0
      %558 = vmatprep.subr.mxu0 %v512
      %559 = vmatpush1.msra.mxu0 %v511
      %560 = vmatprep.subr.mxu0 %v515
      %561 = vmatpush1.msra.mxu0 %v514
      %562 = vmatprep.subr.mxu0 %v518
      %563 = vmatpush1.msra.mxu0 %v517
      %564 = vmatprep.subr.mxu0 %v521
      %565 = vmatpush1.msra.mxu0 %v520
      %566 = vmatprep.subr.mxu0 %v524
      %567 = vmatpush1.msra.mxu0 %v523
      %568 = vmatprep.subr.mxu0 %v527
      %569 = vmatpush1.msra.mxu0 %v526
      %570 = vmatprep.subr.mxu0 %v530
      %571 = vmatpush1.msra.mxu0 %v529
      %572 = vmatprep.subr.mxu0 %v533
      %573 = vmatpush1.msra.mxu0 %v532
      %574 = vmatprep.subr.mxu0 0.0
      %575 = vmatpush1.msra.mxu0 0.0
      %576 = vmatprep.subr.mxu0 0.0
      %577 = vmatpush1.msra.mxu0 0.0
      %578 = vmatprep.subr.mxu0 0.0
      %579 = vmatpush1.msra.mxu0 0.0
      %580 = vmatprep.subr.mxu0 0.0
      %581 = vmatpush1.msra.mxu0 0.0
      %582 = vmatprep.subr.mxu0 0.0
      %583 = vmatpush1.msra.mxu0 0.0
      %584 = vmatprep.subr.mxu0 0.0
      %585 = vmatpush1.msra.mxu0 0.0
      %586 = vmatprep.subr.mxu0 0.0
      %587 = vmatpush1.msra.mxu0 0.0
      %588 = vmatprep.subr.mxu0 0.0
      %589 = vmatpush1.msra.mxu0 0.0
      %590 = vmatprep.subr.mxu0 0.0
      %591 = vmatpush1.msra.mxu0 0.0
      %592 = vmatprep.subr.mxu0 0.0
      %593 = vmatpush1.msra.mxu0 0.0
      %594 = vmatprep.subr.mxu0 0.0
      %595 = vmatpush1.msra.mxu0 0.0
      %596 = vmatprep.subr.mxu0 0.0
      %597 = vmatpush1.msra.mxu0 0.0
      %598 = vmatprep.subr.mxu0 0.0
      %599 = vmatpush1.msra.mxu0 0.0
      %600 = vmatprep.subr.mxu0 0.0
      %601 = vmatpush1.msra.mxu0 0.0
      %602 = vmatprep.subr.mxu0 0.0
      %603 = vmatpush1.msra.mxu0 0.0
      %604 = vmatprep.subr.mxu0 0.0
      %605 = vmatpush1.msra.mxu0 0.0
      %606 = vmatprep.subr.mxu0 0.0
      %607 = vmatpush1.msra.mxu0 0.0
      %608 = vmatprep.subr.mxu0 0.0
      %609 = vmatpush1.msra.mxu0 0.0
      %610 = vmatprep.subr.mxu0 0.0
      %611 = vmatpush1.msra.mxu0 0.0
      %612 = vmatprep.subr.mxu0 0.0
      %613 = vmatpush1.msra.mxu0 0.0
      %614 = vmatprep.subr.mxu0 0.0
      %615 = vmatpush1.msra.mxu0 0.0
      %616 = vmatprep.subr.mxu0 0.0
      %617 = vmatpush1.msra.mxu0 0.0
      %618 = vmatprep.subr.mxu0 0.0
      %619 = vmatpush1.msra.mxu0 0.0
      %620 = vmatprep.subr.mxu0 0.0
      %621 = vmatpush1.msra.mxu0 0.0
      %622 = vmatprep.mubr.f32.mxu0 0.0
      %623 = vmatmul.mubr.f32.gmra.mrb[0].mxu0 %v553
      %v624 = vpop.f32.mrb[0].mxu0
      %v625 = vadd.f32 %v540, %v624
      %v626 = vpop.f32.mrb[0].mxu0
      %v627 = vadd.f32 %v544, %v626
      %628 = vmatprep.mubr.f32.mxu0 0.0
      %629 = vmatmul.mubr.f32.gmra.mrb[0].mxu0 %v556
      %v630 = vpop.f32.mrb[0].mxu0
      %v631 = vadd.f32 %v540, %v630
      %v632 = vpop.f32.mrb[0].mxu0
      %v633 = vadd.f32 %v544, %v632
      %634 = vdwg.mxu0
      %635 = vmatprep.subr.mxu0 0.0
      %636 = vmatpush1.msra.mxu0 %v513
      %637 = vmatprep.subr.mxu0 0.0
      %638 = vmatpush1.msra.mxu0 %v516
      %639 = vmatprep.subr.mxu0 0.0
      %640 = vmatpush1.msra.mxu0 %v519
      %641 = vmatprep.subr.mxu0 0.0
      %642 = vmatpush1.msra.mxu0 %v522
      %643 = vmatprep.subr.mxu0 0.0
      %644 = vmatpush1.msra.mxu0 %v525
      %645 = vmatprep.subr.mxu0 0.0
      %646 = vmatpush1.msra.mxu0 %v528
      %647 = vmatprep.subr.mxu0 0.0
      %648 = vmatpush1.msra.mxu0 %v531
      %649 = vmatprep.subr.mxu0 0.0
      %650 = vmatpush1.msra.mxu0 %v534
      %651 = vmatprep.subr.mxu0 0.0
      %652 = vmatpush1.msra.mxu0 0.0
      %653 = vmatprep.subr.mxu0 0.0
      %654 = vmatpush1.msra.mxu0 0.0
      %655 = vmatprep.subr.mxu0 0.0
      %656 = vmatpush1.msra.mxu0 0.0
      %657 = vmatprep.subr.mxu0 0.0
      %658 = vmatpush1.msra.mxu0 0.0
      %659 = vmatprep.subr.mxu0 0.0
      %660 = vmatpush1.msra.mxu0 0.0
      %661 = vmatprep.subr.mxu0 0.0
      %662 = vmatpush1.msra.mxu0 0.0
      %663 = vmatprep.subr.mxu0 0.0
      %664 = vmatpush1.msra.mxu0 0.0
      %665 = vmatprep.subr.mxu0 0.0
      %666 = vmatpush1.msra.mxu0 0.0
      %667 = vmatprep.subr.mxu0 0.0
      %668 = vmatpush1.msra.mxu0 0.0
      %669 = vmatprep.subr.mxu0 0.0
      %670 = vmatpush1.msra.mxu0 0.0
      %671 = vmatprep.subr.mxu0 0.0
      %672 = vmatpush1.msra.mxu0 0.0
      %673 = vmatprep.subr.mxu0 0.0
      %674 = vmatpush1.msra.mxu0 0.0
      %675 = vmatprep.subr.mxu0 0.0
      %676 = vmatpush1.msra.mxu0 0.0
      %677 = vmatprep.subr.mxu0 0.0
      %678 = vmatpush1.msra.mxu0 0.0
      %679 = vmatprep.subr.mxu0 0.0
      %680 = vmatpush1.msra.mxu0 0.0
      %681 = vmatprep.subr.mxu0 0.0
      %682 = vmatpush1.msra.mxu0 0.0
      %683 = vmatprep.subr.mxu0 0.0
      %684 = vmatpush1.msra.mxu0 0.0
      %685 = vmatprep.subr.mxu0 0.0
      %686 = vmatpush1.msra.mxu0 0.0
      %687 = vmatprep.subr.mxu0 0.0
      %688 = vmatpush1.msra.mxu0 0.0
      %689 = vmatprep.subr.mxu0 0.0
      %690 = vmatpush1.msra.mxu0 0.0
      %691 = vmatprep.subr.mxu0 0.0
      %692 = vmatpush1.msra.mxu0 0.0
      %693 = vmatprep.subr.mxu0 0.0
      %694 = vmatpush1.msra.mxu0 0.0
      %695 = vmatprep.subr.mxu0 0.0
      %696 = vmatpush1.msra.mxu0 0.0
      %697 = vmatprep.subr.mxu0 0.0
      %698 = vmatpush1.msra.mxu0 0.0
      %699 = vmatprep.mubr.f32.mxu0 0.0
      %700 = vmatmul.mubr.f32.gmra.mrb[0].mxu0 %v553
      %v701 = vpop.f32.mrb[0].mxu0
      %v702 = vadd.f32 %v548, %v701
      %v703 = vpop.f32.mrb[0].mxu0
      %704 = vmatprep.mubr.f32.mxu0 0.0
      %705 = vmatmul.mubr.f32.gmra.mrb[0].mxu0 %v556
      %v706 = vpop.f32.mrb[0].mxu0
      %v707 = vadd.f32 %v548, %v706
      %v708 = vpop.f32.mrb[0].mxu0
      %709 = vdwg.mxu0
      %v710 = vld [vmem:[%s425] sm:$0xff]
      %v711 = vld [vmem:[%s425 + $0x8] sm:$0xff]
      %v712 = vld [vmem:[%s431] sm:$0xff]
      %v713 = vld [vmem:[%s431 + $0x8] sm:$0xff]
      %v714 = vmul.f32 %v625, %v710
      %v715 = vmul.f32 %v631, %v711
      %718 = vrot.lane.b32.xlu0 %v712, 64
      %v719 = vpop.permute.xlu0 %718
      %720 = vrot.lane.b32.xlu0 %v713, 64
      %v721 = vpop.permute.xlu0 %720
      %v724 = vmul.f32 %v627, %v719
      %v725 = vmul.f32 %v633, %v721
      %728 = vrot.lane.b32.xlu0 %v724, 64
      %v729 = vpop.permute.xlu0 %728
      %730 = vrot.lane.b32.xlu0 %v725, 64
      %v731 = vpop.permute.xlu0 %730
      %v734 = vadd.f32 %v714, %v729
      %v735 = vadd.f32 %v715, %v731
      %736 = vst.msk [vmem:[%s441] sm:$0xff] %vm465, %v734
      %737 = vst.msk [vmem:[%s441 + $0x8] sm:$0xff] %vm465, %v735
      %740 = vrot.lane.b32.xlu0 %v710, 64
      %v741 = vpop.permute.xlu0 %740
      %742 = vrot.lane.b32.xlu0 %v711, 64
      %v743 = vpop.permute.xlu0 %742
      %v746 = vmul.f32 %v625, %v741
      %v747 = vmul.f32 %v631, %v743
      %v748 = vmul.f32 %v702, %v712
      %v749 = vmul.f32 %v707, %v713
      %752 = vrot.lane.b32.xlu0 %v748, 64
      %v753 = vpop.permute.xlu0 %752
      %754 = vrot.lane.b32.xlu0 %v749, 64
      %v755 = vpop.permute.xlu0 %754
      %v758 = vadd.f32 %v746, %v753
      %v759 = vadd.f32 %v747, %v755
      %762 = vrot.lane.b32.xlu0 %v758, 64
      %v763 = vpop.permute.xlu0 %762
      %764 = vrot.lane.b32.xlu0 %v759, 64
      %v765 = vpop.permute.xlu0 %764
      %768 = vst.msk [vmem:[%s451] sm:$0xff] %vm465, %v763
      %769 = vst.msk [vmem:[%s451 + $0x8] sm:$0xff] %vm465, %v765
      %770 = vst.msk [vmem:[%s461] sm:$0xff] %vm465, %v627
      %771 = vst.msk [vmem:[%s461 + $0x8] sm:$0xff] %vm465, %v633
      %s772 = smul.u32 2, %s26
      %p773 = scmp.lt.s32.totalorder %s25, 1
      %s774 = scalar_select %p773, %s25, 1
      %p775 = scmp.lt.s32.totalorder %s772, 1
      %s776 = scalar_select %p775, %s772, 1
      %s777 = smul.addr %s774, 2
      %s778 = sadd.s32 %s776, %s777
      %s779 = smul.addr %s778, 8
      %s780 = scalar_lea.vmem %s7, %s779
      %s781 = smul.u32 2, %s26
      %p782 = scmp.lt.s32.totalorder %s25, 1
      %s783 = scalar_select %p782, %s25, 1
      %p784 = scmp.lt.s32.totalorder %s781, 1
      %s785 = scalar_select %p784, %s781, 1
      %s786 = smul.addr %s783, 2
      %s787 = sadd.s32 %s785, %s786
      %s788 = smul.addr %s787, 8
      %s789 = scalar_lea.vmem %s8, %s788
      %s790 = smul.u32 2, %s26
      %p791 = scmp.lt.s32.totalorder %s25, 1
      %s792 = scalar_select %p791, %s25, 1
      %p793 = scmp.lt.s32.totalorder %s790, 1
      %s794 = scalar_select %p793, %s790, 1
      %s795 = smul.addr %s792, 2
      %s796 = sadd.s32 %s794, %s795
      %s797 = smul.addr %s796, 8
      %s798 = scalar_lea.vmem %s9, %s797
      // Predicated region
      $region49: #{multi_head_attention_module.3} parent=47 // pred_check
        %p799 = pneg %p217
      $region50: #{multi_head_attention_module.3} parent=47 // pred_check_branch
        %801 = sbr.rel (%p799) target = $region52
      $region51: #{multi_head_attention_module.3} parent=47 // pred_region
        %s802 = smul.u32 2, %s26
      $region52: #{multi_head_attention_module.3} parent=47 // pred_fallthru
        _
      // Predicated region
      $region53: #{multi_head_attention_module.3} parent=47 // pred_check
        %p803 = pneg %p245
      $region54: #{multi_head_attention_module.3} parent=47 // pred_check_branch
        %805 = sbr.rel (%p803) target = $region56
      $region55: #{multi_head_attention_module.3} parent=47 // pred_region
        %s806 = smul.u32 2, %s26
      $region56: #{multi_head_attention_module.3} parent=47 // pred_fallthru
        _
      // Predicated region
      $region57: #{multi_head_attention_module.3} parent=47 // pred_check
        %p807 = pneg %p273
      $region58: #{multi_head_attention_module.3} parent=47 // pred_check_branch
        %809 = sbr.rel (%p807) target = $region60
      $region59: #{multi_head_attention_module.3} parent=47 // pred_region
        %s810 = smul.u32 2, %s26
      $region60: #{multi_head_attention_module.3} parent=47 // pred_fallthru
        _
    $region48: #{multi_head_attention_module.3} parent=5 // pred_fallthru
      _
    %p811 = scmp.le.s32.totalorder 2, %s16
    // Predicated region
    $region61: #{multi_head_attention_module.3} parent=5 // pred_check
      %p812 = pneg %p811
    $region62: #{multi_head_attention_module.3} parent=5 // pred_check_branch
      %814 = sbr.rel (%p812) target = $region64
    $region63: #{multi_head_attention_module.3} parent=5 // pred_region
      %s815 = ssub.s32 %s16, 2
      // Predicated region
      $region65: #{multi_head_attention_module.3} parent=63 // pred_check
        %p816 = pneg %p223
      $region66: #{multi_head_attention_module.3} parent=63 // pred_check_branch
        %818 = sbr.rel (%p816) target = $region68
      $region67: #{multi_head_attention_module.3} parent=63 // pred_region
        %s819 = smul.u32 2, %s28
        %p820 = scmp.lt.s32.totalorder %s27, 1
        %s821 = scalar_select %p820, %s27, 1
        %p822 = scmp.lt.s32.totalorder %s819, 1
        %s823 = scalar_select %p822, %s819, 1
        %s824 = smul.addr %s821, 2
        %s825 = sadd.s32 %s823, %s824
        %s826 = smul.addr %s825, 8
        %s827 = scalar_lea.vmem %s7, %s826
      $region68: #{multi_head_attention_module.3} parent=63 // pred_fallthru
        _
      // Predicated region
      $region69: #{multi_head_attention_module.3} parent=63 // pred_check
        %p828 = pneg %p251
      $region70: #{multi_head_attention_module.3} parent=63 // pred_check_branch
        %830 = sbr.rel (%p828) target = $region72
      $region71: #{multi_head_attention_module.3} parent=63 // pred_region
        %s831 = smul.u32 2, %s28
        %p832 = scmp.lt.s32.totalorder %s27, 1
        %s833 = scalar_select %p832, %s27, 1
        %p834 = scmp.lt.s32.totalorder %s831, 1
        %s835 = scalar_select %p834, %s831, 1
        %s836 = smul.addr %s833, 2
        %s837 = sadd.s32 %s835, %s836
        %s838 = smul.addr %s837, 8
        %s839 = scalar_lea.vmem %s8, %s838
      $region72: #{multi_head_attention_module.3} parent=63 // pred_fallthru
        _
      // Predicated region
      $region73: #{multi_head_attention_module.3} parent=63 // pred_check
        %p840 = pneg %p279
      $region74: #{multi_head_attention_module.3} parent=63 // pred_check_branch
        %842 = sbr.rel (%p840) target = $region76
      $region75: #{multi_head_attention_module.3} parent=63 // pred_region
        %s843 = smul.u32 2, %s28
        %p844 = scmp.lt.s32.totalorder %s27, 1
        %s845 = scalar_select %p844, %s27, 1
        %p846 = scmp.lt.s32.totalorder %s843, 1
        %s847 = scalar_select %p846, %s843, 1
        %s848 = smul.addr %s845, 2
        %s849 = sadd.s32 %s847, %s848
        %s850 = smul.addr %s849, 8
        %s851 = scalar_lea.vmem %s9, %s850
      $region76: #{multi_head_attention_module.3} parent=63 // pred_fallthru
        _
    $region64: #{multi_head_attention_module.3} parent=5 // pred_fallthru
      _
  $region6: #{multi_head_attention_module.3} parent=0 // loop_footer
    %s20 = sadd.s32 1, %s16
  $region7: #{multi_head_attention_module.3} parent=0 // loop_footer_branch
    %15 = sbr.rel target = $region3
  $region8: #{multi_head_attention_module.3} parent=0 // loop_exit
    _

// kernel: multi_head_attention_module.4
$region0: #{multi_head_attention_module.4}
  #allocation0 [shape = 'u32[]', space=smem, size = 0x4, offset = 0x4, fixed_abs, tag = 'smem constant byte address 0x4 - core index']
  #allocation1 [shape = 'u32[144,128]{1,0:T(1,128)}', space=vmem, size = 0x12000, scoped, tag = 'internal scratch']
  %s0 = inlined_call_operand.vmem [shape: f32[2,4,16,16], index: 0, kind: input, shape index: {}]
  %s1 = inlined_call_operand.vmem [shape: f32[2,4,16,16], index: 1, kind: input, shape index: {}]
  %s2 = inlined_call_operand.vmem [shape: f32[2,4,16,16], index: 2, kind: input, shape index: {}]
  %s3 = inlined_call_operand.vmem [shape: f32[2,4,16,16], index: 3, kind: output, shape index: {}]
  %s4 = sld [smem:[#allocation0]]
  $region45: #{multi_head_attention_module.4} parent=0
    _
  %s6 = ssub.s32 1, %s4
  %s7 = scalar_select 0, %s6, %s4
  loop: start=0, step=1, limit=4
  $region2: #{multi_head_attention_module.4} parent=0 // loop_pre_header
    _
  $region3: #{multi_head_attention_module.4} parent=0 // loop_header
    %s9 = sphi 0, %s13
    %p10 = scmp.ge.s32.totalorder %s9, 4
    %s19 = sphi 0, %s21
    %s22 = sphi 0, %s19
    %s23 = sphi 0, %s22
    %s39 = sphi 0, %s23
    %s45 = sphi 0, %s47
    %s48 = sphi 0, %s45
    %s49 = sphi 0, %s48
    %s65 = sphi 0, %s49
    %s71 = sphi 0, %s73
    %s74 = sphi 0, %s71
    %s75 = sphi 0, %s74
    %s91 = sphi 0, %s75
    %s97 = sphi 0, %s99
    %s100 = sphi 0, %s97
    %s101 = sphi 0, %s100
    %s117 = sphi 0, %s101
  $region4: #{multi_head_attention_module.4} parent=0 // loop_header_branch
    %12 = sbr.rel (%p10) target = $region8
  $region5: #{multi_head_attention_module.4} parent=0 // loop_body
    %s14 = ssub.s32 %s9, 1
    %s15 = ssub.s32 %s9, 2
    %s16 = sadd.s32 %s9, 1
    %s17 = ssub.s32 %s9, %s16
    %p18 = scmp.eq.s32.totalorder %s17, 0
    %s20 = sadd.s32 %s19, 1
    %s21 = scalar_select %p18, %s19, %s20
    %p24 = pneg %p18
    %p25 = scmp.eq.s32.totalorder %s9, 1
    %p26 = por %p24, %p25
    %p27 = scmp.ne.s32.totalorder %s19, %s22
    %p28 = scmp.eq.s32.totalorder %s9, 0
    %p29 = por %p27, %p28
    %p30 = scmp.ne.s32.totalorder %s19, %s22
    %p31 = scmp.eq.s32.totalorder %s14, 1
    %p32 = por %p30, %p31
    %p33 = scmp.ne.s32.totalorder %s22, %s23
    %p34 = scmp.eq.s32.totalorder %s14, 0
    %p35 = por %p33, %p34
    %p36 = scmp.ne.s32.totalorder %s22, %s23
    %p37 = scmp.eq.s32.totalorder %s15, 1
    %p38 = por %p36, %p37
    %p40 = scmp.ne.s32.totalorder %s23, %s39
    %p41 = scmp.eq.s32.totalorder %s15, 0
    %p42 = por %p40, %p41
    %s43 = ssub.s32 %s9, %s16
    %p44 = scmp.eq.s32.totalorder %s43, 0
    %s46 = sadd.s32 %s45, 1
    %s47 = scalar_select %p44, %s45, %s46
    %p50 = pneg %p44
    %p51 = scmp.eq.s32.totalorder %s9, 1
    %p52 = por %p50, %p51
    %p53 = scmp.ne.s32.totalorder %s45, %s48
    %p54 = scmp.eq.s32.totalorder %s9, 0
    %p55 = por %p53, %p54
    %p56 = scmp.ne.s32.totalorder %s45, %s48
    %p57 = scmp.eq.s32.totalorder %s14, 1
    %p58 = por %p56, %p57
    %p59 = scmp.ne.s32.totalorder %s48, %s49
    %p60 = scmp.eq.s32.totalorder %s14, 0
    %p61 = por %p59, %p60
    %p62 = scmp.ne.s32.totalorder %s48, %s49
    %p63 = scmp.eq.s32.totalorder %s15, 1
    %p64 = por %p62, %p63
    %p66 = scmp.ne.s32.totalorder %s49, %s65
    %p67 = scmp.eq.s32.totalorder %s15, 0
    %p68 = por %p66, %p67
    %s69 = ssub.s32 %s9, %s16
    %p70 = scmp.eq.s32.totalorder %s69, 0
    %s72 = sadd.s32 %s71, 1
    %s73 = scalar_select %p70, %s71, %s72
    %p76 = pneg %p70
    %p77 = scmp.eq.s32.totalorder %s9, 1
    %p78 = por %p76, %p77
    %p79 = scmp.ne.s32.totalorder %s71, %s74
    %p80 = scmp.eq.s32.totalorder %s9, 0
    %p81 = por %p79, %p80
    %p82 = scmp.ne.s32.totalorder %s71, %s74
    %p83 = scmp.eq.s32.totalorder %s14, 1
    %p84 = por %p82, %p83
    %p85 = scmp.ne.s32.totalorder %s74, %s75
    %p86 = scmp.eq.s32.totalorder %s14, 0
    %p87 = por %p85, %p86
    %p88 = scmp.ne.s32.totalorder %s74, %s75
    %p89 = scmp.eq.s32.totalorder %s15, 1
    %p90 = por %p88, %p89
    %p92 = scmp.ne.s32.totalorder %s75, %s91
    %p93 = scmp.eq.s32.totalorder %s15, 0
    %p94 = por %p92, %p93
    %s95 = ssub.s32 %s9, %s16
    %p96 = scmp.eq.s32.totalorder %s95, 0
    %s98 = sadd.s32 %s97, 1
    %s99 = scalar_select %p96, %s97, %s98
    %p102 = pneg %p96
    %p103 = scmp.eq.s32.totalorder %s9, 1
    %p104 = por %p102, %p103
    %p105 = scmp.ne.s32.totalorder %s97, %s100
    %p106 = scmp.eq.s32.totalorder %s9, 0
    %p107 = por %p105, %p106
    %p108 = scmp.ne.s32.totalorder %s97, %s100
    %p109 = scmp.eq.s32.totalorder %s14, 1
    %p110 = por %p108, %p109
    %p111 = scmp.ne.s32.totalorder %s100, %s101
    %p112 = scmp.eq.s32.totalorder %s14, 0
    %p113 = por %p111, %p112
    %p114 = scmp.ne.s32.totalorder %s100, %s101
    %p115 = scmp.eq.s32.totalorder %s15, 1
    %p116 = por %p114, %p115
    %p118 = scmp.ne.s32.totalorder %s101, %s117
    %p119 = scmp.eq.s32.totalorder %s15, 0
    %p120 = por %p118, %p119
    %p121 = scmp.le.s32.totalorder 1, %s9
    %p122 = scmp.lt.s32.totalorder %s9, 3
    %p123 = pnand %p121, %p122
    %p124 = pneg %p123
    // Predicated region
    $region9: #{multi_head_attention_module.4} parent=5 // pred_check
      _
    $region10: #{multi_head_attention_module.4} parent=5 // pred_check_branch
      %126 = sbr.rel (%p123) target = $region12
    $region11: #{multi_head_attention_module.4} parent=5 // pred_region
      %s127 = ssub.s32 %s9, 1
    $region12: #{multi_head_attention_module.4} parent=5 // pred_fallthru
      _
    %p128 = scmp.lt.s32.totalorder %s9, 2
    // Predicated region
    $region13: #{multi_head_attention_module.4} parent=5 // pred_check
      %p129 = pneg %p128
    $region14: #{multi_head_attention_module.4} parent=5 // pred_check_branch
      %131 = sbr.rel (%p129) target = $region16
    $region15: #{multi_head_attention_module.4} parent=5 // pred_region
      // Predicated region
      $region17: #{multi_head_attention_module.4} parent=15 // pred_check
        %p132 = pneg %p29
      $region18: #{multi_head_attention_module.4} parent=15 // pred_check_branch
        %134 = sbr.rel (%p132) target = $region20
      $region19: #{multi_head_attention_module.4} parent=15 // pred_region
        %p135 = scmp.lt.s32.totalorder %s9, 1
        %s136 = scalar_select %p135, %s9, 1
        %s137 = smul.addr %s136, 8
        %s138 = smul.addr %s137, 8
        %s139 = scalar_lea.vmem %s0, %s138
      $region20: #{multi_head_attention_module.4} parent=15 // pred_fallthru
        _
      // Predicated region
      $region21: #{multi_head_attention_module.4} parent=15 // pred_check
        %p140 = pneg %p55
      $region22: #{multi_head_attention_module.4} parent=15 // pred_check_branch
        %142 = sbr.rel (%p140) target = $region24
      $region23: #{multi_head_attention_module.4} parent=15 // pred_region
        %p143 = scmp.lt.s32.totalorder %s9, 1
        %s144 = scalar_select %p143, %s9, 1
        %s145 = smul.addr %s144, 8
        %s146 = smul.addr %s145, 8
        %s147 = scalar_lea.vmem %s1, %s146
      $region24: #{multi_head_attention_module.4} parent=15 // pred_fallthru
        _
      // Predicated region
      $region25: #{multi_head_attention_module.4} parent=15 // pred_check
        %p148 = pneg %p81
      $region26: #{multi_head_attention_module.4} parent=15 // pred_check_branch
        %150 = sbr.rel (%p148) target = $region28
      $region27: #{multi_head_attention_module.4} parent=15 // pred_region
        %p151 = scmp.lt.s32.totalorder %s9, 1
        %s152 = scalar_select %p151, %s9, 1
        %s153 = smul.addr %s152, 8
        %s154 = smul.addr %s153, 8
        %s155 = scalar_lea.vmem %s2, %s154
      $region28: #{multi_head_attention_module.4} parent=15 // pred_fallthru
        _
    $region16: #{multi_head_attention_module.4} parent=5 // pred_fallthru
      _
    %p156 = scmp.le.s32.totalorder 1, %s9
    %p157 = scmp.lt.s32.totalorder %s9, 3
    %p158 = pnand %p156, %p157
    %p159 = pneg %p158
    // Predicated region
    $region29: #{multi_head_attention_module.4} parent=5 // pred_check
      _
    $region30: #{multi_head_attention_module.4} parent=5 // pred_check_branch
      %161 = sbr.rel (%p158) target = $region32
    $region31: #{multi_head_attention_module.4} parent=5 // pred_region
      %s162 = ssub.s32 %s9, 1
      %p163 = scmp.lt.s32.totalorder %s14, 1
      %s164 = scalar_select %p163, %s14, 1
      %s165 = smul.addr %s164, 8
      %s166 = smul.addr %s165, 8
      %s167 = scalar_lea.vmem %s0, %s166
      %p168 = pneg %p35
      %p169 = pneg %p32
      %p170 = scmp.lt.s32.totalorder %s14, 1
      %s171 = scalar_select %p170, %s14, 1
      %s172 = smul.addr %s171, 8
      %s173 = smul.addr %s172, 8
      %s174 = scalar_lea.vmem %s1, %s173
      %p175 = pneg %p61
      %p176 = pneg %p58
      %p177 = scmp.lt.s32.totalorder %s14, 1
      %s178 = scalar_select %p177, %s14, 1
      %s179 = smul.addr %s178, 8
      %s180 = smul.addr %s179, 8
      %s181 = scalar_lea.vmem %s2, %s180
      %p182 = pneg %p87
      %p183 = pneg %p84
      %p184 = pneg %p113
      %p185 = pneg %p110
      %p186 = scmp.lt.s32.totalorder %s14, 1
      %s187 = scalar_select %p186, %s14, 1
      %s188 = smul.addr %s187, 8
      %s189 = smul.addr %s188, 8
      %s190 = scalar_lea.vmem %s3, %s189
      %p191 = scmp.lt.s32.totalorder %s14, 1
      %s192 = scalar_select %p191, %s14, 1
      %s193 = smul.addr %s192, 8
      %s194 = smul.addr %s193, 8
      %s195 = scalar_lea.vmem %s0, %s194
      %p196 = scmp.lt.s32.totalorder %s14, 1
      %s197 = scalar_select %p196, %s14, 1
      %s198 = smul.addr %s197, 8
      %s199 = smul.addr %s198, 8
      %s200 = scalar_lea.vmem %s1, %s199
      %p201 = scmp.lt.s32.totalorder %s14, 1
      %s202 = scalar_select %p201, %s14, 1
      %s203 = smul.addr %s202, 8
      %s204 = smul.addr %s203, 8
      %s205 = scalar_lea.vmem %s2, %s204
      %p206 = scmp.lt.s32.totalorder %s14, 1
      %s207 = scalar_select %p206, %s14, 1
      %s208 = smul.addr %s207, 8
      %s209 = smul.addr %s208, 8
      %s210 = scalar_lea.vmem %s3, %s209
      %v211 = vld [vmem:[%s195] sm:$0xff]
      %v212 = vld [vmem:[%s195 + $0x8] sm:$0xff]
      %v213 = vld [vmem:[%s195 + $0x10] sm:$0xff]
      %v214 = vld [vmem:[%s195 + $0x18] sm:$0xff]
      %v215 = vld [vmem:[%s195 + $0x20] sm:$0xff]
      %v216 = vld [vmem:[%s195 + $0x28] sm:$0xff]
      %v217 = vld [vmem:[%s195 + $0x30] sm:$0xff]
      %v218 = vld [vmem:[%s195 + $0x38] sm:$0xff]
      %v219 = vld [vmem:[%s200] sm:$0xff]
      %v220 = vld [vmem:[%s200 + $0x8] sm:$0xff]
      %v221 = vld [vmem:[%s200 + $0x10] sm:$0xff]
      %v222 = vld [vmem:[%s200 + $0x18] sm:$0xff]
      %v223 = vld [vmem:[%s200 + $0x20] sm:$0xff]
      %v224 = vld [vmem:[%s200 + $0x28] sm:$0xff]
      %v225 = vld [vmem:[%s200 + $0x30] sm:$0xff]
      %v226 = vld [vmem:[%s200 + $0x38] sm:$0xff]
      %v227 = vld [vmem:[%s205] sm:$0xff]
      %v228 = vld [vmem:[%s205 + $0x8] sm:$0xff]
      %v229 = vld [vmem:[%s205 + $0x10] sm:$0xff]
      %v230 = vld [vmem:[%s205 + $0x18] sm:$0xff]
      %v231 = vld [vmem:[%s205 + $0x20] sm:$0xff]
      %v232 = vld [vmem:[%s205 + $0x28] sm:$0xff]
      %v233 = vld [vmem:[%s205 + $0x30] sm:$0xff]
      %v234 = vld [vmem:[%s205 + $0x38] sm:$0xff]
      %vm235 = vcmask 130048
      %v237 = vsel %vm235, %v211, 0
      %v240 = vsel %vm235, %v212, 0
      %v243 = vsel %vm235, %v219, 0
      %v246 = vsel %vm235, %v220, 0
      %248 = vmatprep.subr.mxu0 0.0
      %249 = vmatpush1.xpose.msra.mxu0 %v243
      %250 = vmatprep.subr.mxu0 0.0
      %251 = vmatpush1.xpose.msra.mxu0 %v246
      %252 = vmatprep.subr.mxu0 0.0
      %253 = vmatpush1.xpose.msra.mxu0 0.0
      %254 = vmatprep.subr.mxu0 0.0
      %255 = vmatpush1.xpose.msra.mxu0 0.0
      %256 = vmatprep.subr.mxu0 0.0
      %257 = vmatpush1.xpose.msra.mxu0 0.0
      %258 = vmatprep.subr.mxu0 0.0
      %259 = vmatpush1.xpose.msra.mxu0 0.0
      %260 = vmatprep.subr.mxu0 0.0
      %261 = vmatpush1.xpose.msra.mxu0 0.0
      %262 = vmatprep.subr.mxu0 0.0
      %263 = vmatpush1.xpose.msra.mxu0 0.0
      %264 = vmatprep.subr.mxu0 0.0
      %265 = vmatpush1.xpose.msra.mxu0 0.0
      %266 = vmatprep.subr.mxu0 0.0
      %267 = vmatpush1.xpose.msra.mxu0 0.0
      %268 = vmatprep.subr.mxu0 0.0
      %269 = vmatpush1.xpose.msra.mxu0 0.0
      %270 = vmatprep.subr.mxu0 0.0
      %271 = vmatpush1.xpose.msra.mxu0 0.0
      %272 = vmatprep.subr.mxu0 0.0
      %273 = vmatpush1.xpose.msra.mxu0 0.0
      %274 = vmatprep.subr.mxu0 0.0
      %275 = vmatpush1.xpose.msra.mxu0 0.0
      %276 = vmatprep.subr.mxu0 0.0
      %277 = vmatpush1.xpose.msra.mxu0 0.0
      %278 = vmatprep.subr.mxu0 0.0
      %279 = vmatpush1.xpose.msra.mxu0 0.0
      %280 = vmatprep.subr.mxu0 0.0
      %281 = vmatpush1.xpose.msra.mxu0 0.0
      %282 = vmatprep.subr.mxu0 0.0
      %283 = vmatpush1.xpose.msra.mxu0 0.0
      %284 = vmatprep.subr.mxu0 0.0
      %285 = vmatpush1.xpose.msra.mxu0 0.0
      %286 = vmatprep.subr.mxu0 0.0
      %287 = vmatpush1.xpose.msra.mxu0 0.0
      %288 = vmatprep.subr.mxu0 0.0
      %289 = vmatpush1.xpose.msra.mxu0 0.0
      %290 = vmatprep.subr.mxu0 0.0
      %291 = vmatpush1.xpose.msra.mxu0 0.0
      %292 = vmatprep.subr.mxu0 0.0
      %293 = vmatpush1.xpose.msra.mxu0 0.0
      %294 = vmatprep.subr.mxu0 0.0
      %295 = vmatpush1.xpose.msra.mxu0 0.0
      %296 = vmatprep.subr.mxu0 0.0
      %297 = vmatpush1.xpose.msra.mxu0 0.0
      %298 = vmatprep.subr.mxu0 0.0
      %299 = vmatpush1.xpose.msra.mxu0 0.0
      %300 = vmatprep.subr.mxu0 0.0
      %301 = vmatpush1.xpose.msra.mxu0 0.0
      %302 = vmatprep.subr.mxu0 0.0
      %303 = vmatpush1.xpose.msra.mxu0 0.0
      %304 = vmatprep.subr.mxu0 0.0
      %305 = vmatpush1.xpose.msra.mxu0 0.0
      %306 = vmatprep.subr.mxu0 0.0
      %307 = vmatpush1.xpose.msra.mxu0 0.0
      %308 = vmatprep.subr.mxu0 0.0
      %309 = vmatpush1.xpose.msra.mxu0 0.0
      %310 = vmatprep.subr.mxu0 0.0
      %311 = vmatpush1.xpose.msra.mxu0 0.0
      %312 = vmatprep.mubr.f32.mxu0 0.0
      %313 = vmatmul.mubr.f32.gmra.mrb[0].mxu0 %v237
      %v314 = vpop.f32.mrb[0].mxu0
      %v315 = vadd.f32 0.0, %v314
      %v316 = vpop.f32.mrb[0].mxu0
      %317 = vmatprep.mubr.f32.mxu0 0.0
      %318 = vmatmul.mubr.f32.gmra.mrb[0].mxu0 %v240
      %v319 = vpop.f32.mrb[0].mxu0
      %v320 = vadd.f32 0.0, %v319
      %v321 = vpop.f32.mrb[0].mxu0
      %322 = vdwg.mxu0
      %v324 = vsel %vm235, %v213, 0
      %v327 = vsel %vm235, %v214, 0
      %v330 = vsel %vm235, %v221, 0
      %v333 = vsel %vm235, %v222, 0
      %335 = vmatprep.subr.mxu0 0.0
      %336 = vmatpush1.xpose.msra.mxu0 %v330
      %337 = vmatprep.subr.mxu0 0.0
      %338 = vmatpush1.xpose.msra.mxu0 %v333
      %339 = vmatprep.subr.mxu0 0.0
      %340 = vmatpush1.xpose.msra.mxu0 0.0
      %341 = vmatprep.subr.mxu0 0.0
      %342 = vmatpush1.xpose.msra.mxu0 0.0
      %343 = vmatprep.subr.mxu0 0.0
      %344 = vmatpush1.xpose.msra.mxu0 0.0
      %345 = vmatprep.subr.mxu0 0.0
      %346 = vmatpush1.xpose.msra.mxu0 0.0
      %347 = vmatprep.subr.mxu0 0.0
      %348 = vmatpush1.xpose.msra.mxu0 0.0
      %349 = vmatprep.subr.mxu0 0.0
      %350 = vmatpush1.xpose.msra.mxu0 0.0
      %351 = vmatprep.subr.mxu0 0.0
      %352 = vmatpush1.xpose.msra.mxu0 0.0
      %353 = vmatprep.subr.mxu0 0.0
      %354 = vmatpush1.xpose.msra.mxu0 0.0
      %355 = vmatprep.subr.mxu0 0.0
      %356 = vmatpush1.xpose.msra.mxu0 0.0
      %357 = vmatprep.subr.mxu0 0.0
      %358 = vmatpush1.xpose.msra.mxu0 0.0
      %359 = vmatprep.subr.mxu0 0.0
      %360 = vmatpush1.xpose.msra.mxu0 0.0
      %361 = vmatprep.subr.mxu0 0.0
      %362 = vmatpush1.xpose.msra.mxu0 0.0
      %363 = vmatprep.subr.mxu0 0.0
      %364 = vmatpush1.xpose.msra.mxu0 0.0
      %365 = vmatprep.subr.mxu0 0.0
      %366 = vmatpush1.xpose.msra.mxu0 0.0
      %367 = vmatprep.subr.mxu0 0.0
      %368 = vmatpush1.xpose.msra.mxu0 0.0
      %369 = vmatprep.subr.mxu0 0.0
      %370 = vmatpush1.xpose.msra.mxu0 0.0
      %371 = vmatprep.subr.mxu0 0.0
      %372 = vmatpush1.xpose.msra.mxu0 0.0
      %373 = vmatprep.subr.mxu0 0.0
      %374 = vmatpush1.xpose.msra.mxu0 0.0
      %375 = vmatprep.subr.mxu0 0.0
      %376 = vmatpush1.xpose.msra.mxu0 0.0
      %377 = vmatprep.subr.mxu0 0.0
      %378 = vmatpush1.xpose.msra.mxu0 0.0
      %379 = vmatprep.subr.mxu0 0.0
      %380 = vmatpush1.xpose.msra.mxu0 0.0
      %381 = vmatprep.subr.mxu0 0.0
      %382 = vmatpush1.xpose.msra.mxu0 0.0
      %383 = vmatprep.subr.mxu0 0.0
      %384 = vmatpush1.xpose.msra.mxu0 0.0
      %385 = vmatprep.subr.mxu0 0.0
      %386 = vmatpush1.xpose.msra.mxu0 0.0
      %387 = vmatprep.subr.mxu0 0.0
      %388 = vmatpush1.xpose.msra.mxu0 0.0
      %389 = vmatprep.subr.mxu0 0.0
      %390 = vmatpush1.xpose.msra.mxu0 0.0
      %391 = vmatprep.subr.mxu0 0.0
      %392 = vmatpush1.xpose.msra.mxu0 0.0
      %393 = vmatprep.subr.mxu0 0.0
      %394 = vmatpush1.xpose.msra.mxu0 0.0
      %395 = vmatprep.subr.mxu0 0.0
      %396 = vmatpush1.xpose.msra.mxu0 0.0
      %397 = vmatprep.subr.mxu0 0.0
      %398 = vmatpush1.xpose.msra.mxu0 0.0
      %399 = vmatprep.mubr.f32.mxu0 0.0
      %400 = vmatmul.mubr.f32.gmra.mrb[0].mxu0 %v324
      %v401 = vpop.f32.mrb[0].mxu0
      %v402 = vadd.f32 0.0, %v401
      %v403 = vpop.f32.mrb[0].mxu0
      %404 = vmatprep.mubr.f32.mxu0 0.0
      %405 = vmatmul.mubr.f32.gmra.mrb[0].mxu0 %v327
      %v406 = vpop.f32.mrb[0].mxu0
      %v407 = vadd.f32 0.0, %v406
      %v408 = vpop.f32.mrb[0].mxu0
      %409 = vdwg.mxu0
      %v411 = vsel %vm235, %v215, 0
      %v414 = vsel %vm235, %v216, 0
      %v417 = vsel %vm235, %v223, 0
      %v420 = vsel %vm235, %v224, 0
      %422 = vmatprep.subr.mxu0 0.0
      %423 = vmatpush1.xpose.msra.mxu0 %v417
      %424 = vmatprep.subr.mxu0 0.0
      %425 = vmatpush1.xpose.msra.mxu0 %v420
      %426 = vmatprep.subr.mxu0 0.0
      %427 = vmatpush1.xpose.msra.mxu0 0.0
      %428 = vmatprep.subr.mxu0 0.0
      %429 = vmatpush1.xpose.msra.mxu0 0.0
      %430 = vmatprep.subr.mxu0 0.0
      %431 = vmatpush1.xpose.msra.mxu0 0.0
      %432 = vmatprep.subr.mxu0 0.0
      %433 = vmatpush1.xpose.msra.mxu0 0.0
      %434 = vmatprep.subr.mxu0 0.0
      %435 = vmatpush1.xpose.msra.mxu0 0.0
      %436 = vmatprep.subr.mxu0 0.0
      %437 = vmatpush1.xpose.msra.mxu0 0.0
      %438 = vmatprep.subr.mxu0 0.0
      %439 = vmatpush1.xpose.msra.mxu0 0.0
      %440 = vmatprep.subr.mxu0 0.0
      %441 = vmatpush1.xpose.msra.mxu0 0.0
      %442 = vmatprep.subr.mxu0 0.0
      %443 = vmatpush1.xpose.msra.mxu0 0.0
      %444 = vmatprep.subr.mxu0 0.0
      %445 = vmatpush1.xpose.msra.mxu0 0.0
      %446 = vmatprep.subr.mxu0 0.0
      %447 = vmatpush1.xpose.msra.mxu0 0.0
      %448 = vmatprep.subr.mxu0 0.0
      %449 = vmatpush1.xpose.msra.mxu0 0.0
      %450 = vmatprep.subr.mxu0 0.0
      %451 = vmatpush1.xpose.msra.mxu0 0.0
      %452 = vmatprep.subr.mxu0 0.0
      %453 = vmatpush1.xpose.msra.mxu0 0.0
      %454 = vmatprep.subr.mxu0 0.0
      %455 = vmatpush1.xpose.msra.mxu0 0.0
      %456 = vmatprep.subr.mxu0 0.0
      %457 = vmatpush1.xpose.msra.mxu0 0.0
      %458 = vmatprep.subr.mxu0 0.0
      %459 = vmatpush1.xpose.msra.mxu0 0.0
      %460 = vmatprep.subr.mxu0 0.0
      %461 = vmatpush1.xpose.msra.mxu0 0.0
      %462 = vmatprep.subr.mxu0 0.0
      %463 = vmatpush1.xpose.msra.mxu0 0.0
      %464 = vmatprep.subr.mxu0 0.0
      %465 = vmatpush1.xpose.msra.mxu0 0.0
      %466 = vmatprep.subr.mxu0 0.0
      %467 = vmatpush1.xpose.msra.mxu0 0.0
      %468 = vmatprep.subr.mxu0 0.0
      %469 = vmatpush1.xpose.msra.mxu0 0.0
      %470 = vmatprep.subr.mxu0 0.0
      %471 = vmatpush1.xpose.msra.mxu0 0.0
      %472 = vmatprep.subr.mxu0 0.0
      %473 = vmatpush1.xpose.msra.mxu0 0.0
      %474 = vmatprep.subr.mxu0 0.0
      %475 = vmatpush1.xpose.msra.mxu0 0.0
      %476 = vmatprep.subr.mxu0 0.0
      %477 = vmatpush1.xpose.msra.mxu0 0.0
      %478 = vmatprep.subr.mxu0 0.0
      %479 = vmatpush1.xpose.msra.mxu0 0.0
      %480 = vmatprep.subr.mxu0 0.0
      %481 = vmatpush1.xpose.msra.mxu0 0.0
      %482 = vmatprep.subr.mxu0 0.0
      %483 = vmatpush1.xpose.msra.mxu0 0.0
      %484 = vmatprep.subr.mxu0 0.0
      %485 = vmatpush1.xpose.msra.mxu0 0.0
      %486 = vmatprep.mubr.f32.mxu0 0.0
      %487 = vmatmul.mubr.f32.gmra.mrb[0].mxu0 %v411
      %v488 = vpop.f32.mrb[0].mxu0
      %v489 = vadd.f32 0.0, %v488
      %v490 = vpop.f32.mrb[0].mxu0
      %491 = vmatprep.mubr.f32.mxu0 0.0
      %492 = vmatmul.mubr.f32.gmra.mrb[0].mxu0 %v414
      %v493 = vpop.f32.mrb[0].mxu0
      %v494 = vadd.f32 0.0, %v493
      %v495 = vpop.f32.mrb[0].mxu0
      %496 = vdwg.mxu0
      %v498 = vsel %vm235, %v217, 0
      %v501 = vsel %vm235, %v218, 0
      %v504 = vsel %vm235, %v225, 0
      %v507 = vsel %vm235, %v226, 0
      %509 = vmatprep.subr.mxu0 0.0
      %510 = vmatpush1.xpose.msra.mxu0 %v504
      %511 = vmatprep.subr.mxu0 0.0
      %512 = vmatpush1.xpose.msra.mxu0 %v507
      %513 = vmatprep.subr.mxu0 0.0
      %514 = vmatpush1.xpose.msra.mxu0 0.0
      %515 = vmatprep.subr.mxu0 0.0
      %516 = vmatpush1.xpose.msra.mxu0 0.0
      %517 = vmatprep.subr.mxu0 0.0
      %518 = vmatpush1.xpose.msra.mxu0 0.0
      %519 = vmatprep.subr.mxu0 0.0
      %520 = vmatpush1.xpose.msra.mxu0 0.0
      %521 = vmatprep.subr.mxu0 0.0
      %522 = vmatpush1.xpose.msra.mxu0 0.0
      %523 = vmatprep.subr.mxu0 0.0
      %524 = vmatpush1.xpose.msra.mxu0 0.0
      %525 = vmatprep.subr.mxu0 0.0
      %526 = vmatpush1.xpose.msra.mxu0 0.0
      %527 = vmatprep.subr.mxu0 0.0
      %528 = vmatpush1.xpose.msra.mxu0 0.0
      %529 = vmatprep.subr.mxu0 0.0
      %530 = vmatpush1.xpose.msra.mxu0 0.0
      %531 = vmatprep.subr.mxu0 0.0
      %532 = vmatpush1.xpose.msra.mxu0 0.0
      %533 = vmatprep.subr.mxu0 0.0
      %534 = vmatpush1.xpose.msra.mxu0 0.0
      %535 = vmatprep.subr.mxu0 0.0
      %536 = vmatpush1.xpose.msra.mxu0 0.0
      %537 = vmatprep.subr.mxu0 0.0
      %538 = vmatpush1.xpose.msra.mxu0 0.0
      %539 = vmatprep.subr.mxu0 0.0
      %540 = vmatpush1.xpose.msra.mxu0 0.0
      %541 = vmatprep.subr.mxu0 0.0
      %542 = vmatpush1.xpose.msra.mxu0 0.0
      %543 = vmatprep.subr.mxu0 0.0
      %544 = vmatpush1.xpose.msra.mxu0 0.0
      %545 = vmatprep.subr.mxu0 0.0
      %546 = vmatpush1.xpose.msra.mxu0 0.0
      %547 = vmatprep.subr.mxu0 0.0
      %548 = vmatpush1.xpose.msra.mxu0 0.0
      %549 = vmatprep.subr.mxu0 0.0
      %550 = vmatpush1.xpose.msra.mxu0 0.0
      %551 = vmatprep.subr.mxu0 0.0
      %552 = vmatpush1.xpose.msra.mxu0 0.0
      %553 = vmatprep.subr.mxu0 0.0
      %554 = vmatpush1.xpose.msra.mxu0 0.0
      %555 = vmatprep.subr.mxu0 0.0
      %556 = vmatpush1.xpose.msra.mxu0 0.0
      %557 = vmatprep.subr.mxu0 0.0
      %558 = vmatpush1.xpose.msra.mxu0 0.0
      %559 = vmatprep.subr.mxu0 0.0
      %560 = vmatpush1.xpose.msra.mxu0 0.0
      %561 = vmatprep.subr.mxu0 0.0
      %562 = vmatpush1.xpose.msra.mxu0 0.0
      %563 = vmatprep.subr.mxu0 0.0
      %564 = vmatpush1.xpose.msra.mxu0 0.0
      %565 = vmatprep.subr.mxu0 0.0
      %566 = vmatpush1.xpose.msra.mxu0 0.0
      %567 = vmatprep.subr.mxu0 0.0
      %568 = vmatpush1.xpose.msra.mxu0 0.0
      %569 = vmatprep.subr.mxu0 0.0
      %570 = vmatpush1.xpose.msra.mxu0 0.0
      %571 = vmatprep.subr.mxu0 0.0
      %572 = vmatpush1.xpose.msra.mxu0 0.0
      %573 = vmatprep.mubr.f32.mxu0 0.0
      %574 = vmatmul.mubr.f32.gmra.mrb[0].mxu0 %v498
      %v575 = vpop.f32.mrb[0].mxu0
      %v576 = vadd.f32 0.0, %v575
      %v577 = vpop.f32.mrb[0].mxu0
      %578 = vmatprep.mubr.f32.mxu0 0.0
      %579 = vmatmul.mubr.f32.gmra.mrb[0].mxu0 %v501
      %v580 = vpop.f32.mrb[0].mxu0
      %v581 = vadd.f32 0.0, %v580
      %v582 = vpop.f32.mrb[0].mxu0
      %583 = vdwg.mxu0
      %v584 = vmul.f32 %v315, 0.25
      %v585 = vmul.f32 %v320, 0.25
      %v586 = vmul.f32 %v402, 0.25
      %v587 = vmul.f32 %v407, 0.25
      %v588 = vmul.f32 %v489, 0.25
      %v589 = vmul.f32 %v494, 0.25
      %v590 = vmul.f32 %v576, 0.25
      %v591 = vmul.f32 %v581, 0.25
      %v592 = vsel %vm235, %v584, -inf
      %593 = vmax.xlane.f32.xlu0 %v592
      %v594 = vpop.xlane.xlu0 %593
      %v595 = vsel %vm235, %v585, -inf
      %596 = vmax.xlane.f32.xlu0 %v595
      %v597 = vpop.xlane.xlu0 %596
      %v598 = vsel %vm235, %v586, -inf
      %599 = vmax.xlane.f32.xlu0 %v598
      %v600 = vpop.xlane.xlu0 %599
      %v601 = vsel %vm235, %v587, -inf
      %602 = vmax.xlane.f32.xlu0 %v601
      %v603 = vpop.xlane.xlu0 %602
      %v604 = vsel %vm235, %v588, -inf
      %605 = vmax.xlane.f32.xlu0 %v604
      %v606 = vpop.xlane.xlu0 %605
      %v607 = vsel %vm235, %v589, -inf
      %608 = vmax.xlane.f32.xlu0 %v607
      %v609 = vpop.xlane.xlu0 %608
      %v610 = vsel %vm235, %v590, -inf
      %611 = vmax.xlane.f32.xlu0 %v610
      %v612 = vpop.xlane.xlu0 %611
      %v613 = vsel %vm235, %v591, -inf
      %614 = vmax.xlane.f32.xlu0 %v613
      %v615 = vpop.xlane.xlu0 %614
      %v616 = vsub.f32 %v584, %v594
      %v617 = vsub.f32 %v585, %v597
      %v618 = vsub.f32 %v586, %v600
      %v619 = vsub.f32 %v587, %v603
      %v620 = vsub.f32 %v588, %v606
      %v621 = vsub.f32 %v589, %v609
      %v622 = vsub.f32 %v590, %v612
      %v623 = vsub.f32 %v591, %v615
      %v624 = vmul.f32 %v616, 1.442695
      %v625 = vpow.pop %v624
      %v626 = vmul.f32 %v617, 1.442695
      %v627 = vpow.pop %v626
      %v628 = vmul.f32 %v618, 1.442695
      %v629 = vpow.pop %v628
      %v630 = vmul.f32 %v619, 1.442695
      %v631 = vpow.pop %v630
      %v632 = vmul.f32 %v620, 1.442695
      %v633 = vpow.pop %v632
      %v634 = vmul.f32 %v621, 1.442695
      %v635 = vpow.pop %v634
      %v636 = vmul.f32 %v622, 1.442695
      %v637 = vpow.pop %v636
      %v638 = vmul.f32 %v623, 1.442695
      %v639 = vpow.pop %v638
      %v640 = vsel %vm235, %v625, 0.0
      %641 = vadd.xlane.f32.xlu0 %v640
      %v642 = vpop.xlane.xlu0 %641
      %v643 = vsel %vm235, %v627, 0.0
      %644 = vadd.xlane.f32.xlu0 %v643
      %v645 = vpop.xlane.xlu0 %644
      %v646 = vsel %vm235, %v629, 0.0
      %647 = vadd.xlane.f32.xlu0 %v646
      %v648 = vpop.xlane.xlu0 %647
      %v649 = vsel %vm235, %v631, 0.0
      %650 = vadd.xlane.f32.xlu0 %v649
      %v651 = vpop.xlane.xlu0 %650
      %v652 = vsel %vm235, %v633, 0.0
      %653 = vadd.xlane.f32.xlu0 %v652
      %v654 = vpop.xlane.xlu0 %653
      %v655 = vsel %vm235, %v635, 0.0
      %656 = vadd.xlane.f32.xlu0 %v655
      %v657 = vpop.xlane.xlu0 %656
      %v658 = vsel %vm235, %v637, 0.0
      %659 = vadd.xlane.f32.xlu0 %v658
      %v660 = vpop.xlane.xlu0 %659
      %v661 = vsel %vm235, %v639, 0.0
      %662 = vadd.xlane.f32.xlu0 %v661
      %v663 = vpop.xlane.xlu0 %662
      %v664 = vrcp.pop %v642
      %v665 = vrcp.pop %v645
      %v666 = vrcp.pop %v648
      %v667 = vrcp.pop %v651
      %v668 = vrcp.pop %v654
      %v669 = vrcp.pop %v657
      %v670 = vrcp.pop %v660
      %v671 = vrcp.pop %v663
      %v672 = vmul.f32 %v625, %v664
      %v673 = vmul.f32 %v627, %v665
      %v674 = vmul.f32 %v629, %v666
      %v675 = vmul.f32 %v631, %v667
      %v676 = vmul.f32 %v633, %v668
      %v677 = vmul.f32 %v635, %v669
      %v678 = vmul.f32 %v637, %v670
      %v679 = vmul.f32 %v639, %v671
      %v681 = vsel %vm235, %v672, 0
      %v684 = vsel %vm235, %v673, 0
      %686 = vmatprep.subr.mxu0 0.0
      %687 = vmatpush1.msra.mxu0 %v227
      %688 = vmatprep.subr.mxu0 0.0
      %689 = vmatpush1.msra.mxu0 %v228
      %690 = vmatprep.subr.mxu0 0.0
      %691 = vmatpush1.msra.mxu0 0.0
      %692 = vmatprep.subr.mxu0 0.0
      %693 = vmatpush1.msra.mxu0 0.0
      %694 = vmatprep.subr.mxu0 0.0
      %695 = vmatpush1.msra.mxu0 0.0
      %696 = vmatprep.subr.mxu0 0.0
      %697 = vmatpush1.msra.mxu0 0.0
      %698 = vmatprep.subr.mxu0 0.0
      %699 = vmatpush1.msra.mxu0 0.0
      %700 = vmatprep.subr.mxu0 0.0
      %701 = vmatpush1.msra.mxu0 0.0
      %702 = vmatprep.subr.mxu0 0.0
      %703 = vmatpush1.msra.mxu0 0.0
      %704 = vmatprep.subr.mxu0 0.0
      %705 = vmatpush1.msra.mxu0 0.0
      %706 = vmatprep.subr.mxu0 0.0
      %707 = vmatpush1.msra.mxu0 0.0
      %708 = vmatprep.subr.mxu0 0.0
      %709 = vmatpush1.msra.mxu0 0.0
      %710 = vmatprep.subr.mxu0 0.0
      %711 = vmatpush1.msra.mxu0 0.0
      %712 = vmatprep.subr.mxu0 0.0
      %713 = vmatpush1.msra.mxu0 0.0
      %714 = vmatprep.subr.mxu0 0.0
      %715 = vmatpush1.msra.mxu0 0.0
      %716 = vmatprep.subr.mxu0 0.0
      %717 = vmatpush1.msra.mxu0 0.0
      %718 = vmatprep.subr.mxu0 0.0
      %719 = vmatpush1.msra.mxu0 0.0
      %720 = vmatprep.subr.mxu0 0.0
      %721 = vmatpush1.msra.mxu0 0.0
      %722 = vmatprep.subr.mxu0 0.0
      %723 = vmatpush1.msra.mxu0 0.0
      %724 = vmatprep.subr.mxu0 0.0
      %725 = vmatpush1.msra.mxu0 0.0
      %726 = vmatprep.subr.mxu0 0.0
      %727 = vmatpush1.msra.mxu0 0.0
      %728 = vmatprep.subr.mxu0 0.0
      %729 = vmatpush1.msra.mxu0 0.0
      %730 = vmatprep.subr.mxu0 0.0
      %731 = vmatpush1.msra.mxu0 0.0
      %732 = vmatprep.subr.mxu0 0.0
      %733 = vmatpush1.msra.mxu0 0.0
      %734 = vmatprep.subr.mxu0 0.0
      %735 = vmatpush1.msra.mxu0 0.0
      %736 = vmatprep.subr.mxu0 0.0
      %737 = vmatpush1.msra.mxu0 0.0
      %738 = vmatprep.subr.mxu0 0.0
      %739 = vmatpush1.msra.mxu0 0.0
      %740 = vmatprep.subr.mxu0 0.0
      %741 = vmatpush1.msra.mxu0 0.0
      %742 = vmatprep.subr.mxu0 0.0
      %743 = vmatpush1.msra.mxu0 0.0
      %744 = vmatprep.subr.mxu0 0.0
      %745 = vmatpush1.msra.mxu0 0.0
      %746 = vmatprep.subr.mxu0 0.0
      %747 = vmatpush1.msra.mxu0 0.0
      %748 = vmatprep.subr.mxu0 0.0
      %749 = vmatpush1.msra.mxu0 0.0
      %750 = vmatprep.mubr.f32.mxu0 0.0
      %751 = vmatmul.mubr.f32.gmra.mrb[0].mxu0 %v681
      %v752 = vpop.f32.mrb[0].mxu0
      %v753 = vadd.f32 0.0, %v752
      %v754 = vpop.f32.mrb[0].mxu0
      %755 = vmatprep.mubr.f32.mxu0 0.0
      %756 = vmatmul.mubr.f32.gmra.mrb[0].mxu0 %v684
      %v757 = vpop.f32.mrb[0].mxu0
      %v758 = vadd.f32 0.0, %v757
      %v759 = vpop.f32.mrb[0].mxu0
      %760 = vdwg.mxu0
      %v762 = vsel %vm235, %v674, 0
      %v765 = vsel %vm235, %v675, 0
      %767 = vmatprep.subr.mxu0 0.0
      %768 = vmatpush1.msra.mxu0 %v229
      %769 = vmatprep.subr.mxu0 0.0
      %770 = vmatpush1.msra.mxu0 %v230
      %771 = vmatprep.subr.mxu0 0.0
      %772 = vmatpush1.msra.mxu0 0.0
      %773 = vmatprep.subr.mxu0 0.0
      %774 = vmatpush1.msra.mxu0 0.0
      %775 = vmatprep.subr.mxu0 0.0
      %776 = vmatpush1.msra.mxu0 0.0
      %777 = vmatprep.subr.mxu0 0.0
      %778 = vmatpush1.msra.mxu0 0.0
      %779 = vmatprep.subr.mxu0 0.0
      %780 = vmatpush1.msra.mxu0 0.0
      %781 = vmatprep.subr.mxu0 0.0
      %782 = vmatpush1.msra.mxu0 0.0
      %783 = vmatprep.subr.mxu0 0.0
      %784 = vmatpush1.msra.mxu0 0.0
      %785 = vmatprep.subr.mxu0 0.0
      %786 = vmatpush1.msra.mxu0 0.0
      %787 = vmatprep.subr.mxu0 0.0
      %788 = vmatpush1.msra.mxu0 0.0
      %789 = vmatprep.subr.mxu0 0.0
      %790 = vmatpush1.msra.mxu0 0.0
      %791 = vmatprep.subr.mxu0 0.0
      %792 = vmatpush1.msra.mxu0 0.0
      %793 = vmatprep.subr.mxu0 0.0
      %794 = vmatpush1.msra.mxu0 0.0
      %795 = vmatprep.subr.mxu0 0.0
      %796 = vmatpush1.msra.mxu0 0.0
      %797 = vmatprep.subr.mxu0 0.0
      %798 = vmatpush1.msra.mxu0 0.0
      %799 = vmatprep.subr.mxu0 0.0
      %800 = vmatpush1.msra.mxu0 0.0
      %801 = vmatprep.subr.mxu0 0.0
      %802 = vmatpush1.msra.mxu0 0.0
      %803 = vmatprep.subr.mxu0 0.0
      %804 = vmatpush1.msra.mxu0 0.0
      %805 = vmatprep.subr.mxu0 0.0
      %806 = vmatpush1.msra.mxu0 0.0
      %807 = vmatprep.subr.mxu0 0.0
      %808 = vmatpush1.msra.mxu0 0.0
      %809 = vmatprep.subr.mxu0 0.0
      %810 = vmatpush1.msra.mxu0 0.0
      %811 = vmatprep.subr.mxu0 0.0
      %812 = vmatpush1.msra.mxu0 0.0
      %813 = vmatprep.subr.mxu0 0.0
      %814 = vmatpush1.msra.mxu0 0.0
      %815 = vmatprep.subr.mxu0 0.0
      %816 = vmatpush1.msra.mxu0 0.0
      %817 = vmatprep.subr.mxu0 0.0
      %818 = vmatpush1.msra.mxu0 0.0
      %819 = vmatprep.subr.mxu0 0.0
      %820 = vmatpush1.msra.mxu0 0.0
      %821 = vmatprep.subr.mxu0 0.0
      %822 = vmatpush1.msra.mxu0 0.0
      %823 = vmatprep.subr.mxu0 0.0
      %824 = vmatpush1.msra.mxu0 0.0
      %825 = vmatprep.subr.mxu0 0.0
      %826 = vmatpush1.msra.mxu0 0.0
      %827 = vmatprep.subr.mxu0 0.0
      %828 = vmatpush1.msra.mxu0 0.0
      %829 = vmatprep.subr.mxu0 0.0
      %830 = vmatpush1.msra.mxu0 0.0
      %831 = vmatprep.mubr.f32.mxu0 0.0
      %832 = vmatmul.mubr.f32.gmra.mrb[0].mxu0 %v762
      %v833 = vpop.f32.mrb[0].mxu0
      %v834 = vadd.f32 0.0, %v833
      %v835 = vpop.f32.mrb[0].mxu0
      %836 = vmatprep.mubr.f32.mxu0 0.0
      %837 = vmatmul.mubr.f32.gmra.mrb[0].mxu0 %v765
      %v838 = vpop.f32.mrb[0].mxu0
      %v839 = vadd.f32 0.0, %v838
      %v840 = vpop.f32.mrb[0].mxu0
      %841 = vdwg.mxu0
      %v843 = vsel %vm235, %v676, 0
      %v846 = vsel %vm235, %v677, 0
      %848 = vmatprep.subr.mxu0 0.0
      %849 = vmatpush1.msra.mxu0 %v231
      %850 = vmatprep.subr.mxu0 0.0
      %851 = vmatpush1.msra.mxu0 %v232
      %852 = vmatprep.subr.mxu0 0.0
      %853 = vmatpush1.msra.mxu0 0.0
      %854 = vmatprep.subr.mxu0 0.0
      %855 = vmatpush1.msra.mxu0 0.0
      %856 = vmatprep.subr.mxu0 0.0
      %857 = vmatpush1.msra.mxu0 0.0
      %858 = vmatprep.subr.mxu0 0.0
      %859 = vmatpush1.msra.mxu0 0.0
      %860 = vmatprep.subr.mxu0 0.0
      %861 = vmatpush1.msra.mxu0 0.0
      %862 = vmatprep.subr.mxu0 0.0
      %863 = vmatpush1.msra.mxu0 0.0
      %864 = vmatprep.subr.mxu0 0.0
      %865 = vmatpush1.msra.mxu0 0.0
      %866 = vmatprep.subr.mxu0 0.0
      %867 = vmatpush1.msra.mxu0 0.0
      %868 = vmatprep.subr.mxu0 0.0
      %869 = vmatpush1.msra.mxu0 0.0
      %870 = vmatprep.subr.mxu0 0.0
      %871 = vmatpush1.msra.mxu0 0.0
      %872 = vmatprep.subr.mxu0 0.0
      %873 = vmatpush1.msra.mxu0 0.0
      %874 = vmatprep.subr.mxu0 0.0
      %875 = vmatpush1.msra.mxu0 0.0
      %876 = vmatprep.subr.mxu0 0.0
      %877 = vmatpush1.msra.mxu0 0.0
      %878 = vmatprep.subr.mxu0 0.0
      %879 = vmatpush1.msra.mxu0 0.0
      %880 = vmatprep.subr.mxu0 0.0
      %881 = vmatpush1.msra.mxu0 0.0
      %882 = vmatprep.subr.mxu0 0.0
      %883 = vmatpush1.msra.mxu0 0.0
      %884 = vmatprep.subr.mxu0 0.0
      %885 = vmatpush1.msra.mxu0 0.0
      %886 = vmatprep.subr.mxu0 0.0
      %887 = vmatpush1.msra.mxu0 0.0
      %888 = vmatprep.subr.mxu0 0.0
      %889 = vmatpush1.msra.mxu0 0.0
      %890 = vmatprep.subr.mxu0 0.0
      %891 = vmatpush1.msra.mxu0 0.0
      %892 = vmatprep.subr.mxu0 0.0
      %893 = vmatpush1.msra.mxu0 0.0
      %894 = vmatprep.subr.mxu0 0.0
      %895 = vmatpush1.msra.mxu0 0.0
      %896 = vmatprep.subr.mxu0 0.0
      %897 = vmatpush1.msra.mxu0 0.0
      %898 = vmatprep.subr.mxu0 0.0
      %899 = vmatpush1.msra.mxu0 0.0
      %900 = vmatprep.subr.mxu0 0.0
      %901 = vmatpush1.msra.mxu0 0.0
      %902 = vmatprep.subr.mxu0 0.0
      %903 = vmatpush1.msra.mxu0 0.0
      %904 = vmatprep.subr.mxu0 0.0
      %905 = vmatpush1.msra.mxu0 0.0
      %906 = vmatprep.subr.mxu0 0.0
      %907 = vmatpush1.msra.mxu0 0.0
      %908 = vmatprep.subr.mxu0 0.0
      %909 = vmatpush1.msra.mxu0 0.0
      %910 = vmatprep.subr.mxu0 0.0
      %911 = vmatpush1.msra.mxu0 0.0
      %912 = vmatprep.mubr.f32.mxu0 0.0
      %913 = vmatmul.mubr.f32.gmra.mrb[0].mxu0 %v843
      %v914 = vpop.f32.mrb[0].mxu0
      %v915 = vadd.f32 0.0, %v914
      %v916 = vpop.f32.mrb[0].mxu0
      %917 = vmatprep.mubr.f32.mxu0 0.0
      %918 = vmatmul.mubr.f32.gmra.mrb[0].mxu0 %v846
      %v919 = vpop.f32.mrb[0].mxu0
      %v920 = vadd.f32 0.0, %v919
      %v921 = vpop.f32.mrb[0].mxu0
      %922 = vdwg.mxu0
      %v924 = vsel %vm235, %v678, 0
      %v927 = vsel %vm235, %v679, 0
      %929 = vmatprep.subr.mxu0 0.0
      %930 = vmatpush1.msra.mxu0 %v233
      %931 = vmatprep.subr.mxu0 0.0
      %932 = vmatpush1.msra.mxu0 %v234
      %933 = vmatprep.subr.mxu0 0.0
      %934 = vmatpush1.msra.mxu0 0.0
      %935 = vmatprep.subr.mxu0 0.0
      %936 = vmatpush1.msra.mxu0 0.0
      %937 = vmatprep.subr.mxu0 0.0
      %938 = vmatpush1.msra.mxu0 0.0
      %939 = vmatprep.subr.mxu0 0.0
      %940 = vmatpush1.msra.mxu0 0.0
      %941 = vmatprep.subr.mxu0 0.0
      %942 = vmatpush1.msra.mxu0 0.0
      %943 = vmatprep.subr.mxu0 0.0
      %944 = vmatpush1.msra.mxu0 0.0
      %945 = vmatprep.subr.mxu0 0.0
      %946 = vmatpush1.msra.mxu0 0.0
      %947 = vmatprep.subr.mxu0 0.0
      %948 = vmatpush1.msra.mxu0 0.0
      %949 = vmatprep.subr.mxu0 0.0
      %950 = vmatpush1.msra.mxu0 0.0
      %951 = vmatprep.subr.mxu0 0.0
      %952 = vmatpush1.msra.mxu0 0.0
      %953 = vmatprep.subr.mxu0 0.0
      %954 = vmatpush1.msra.mxu0 0.0
      %955 = vmatprep.subr.mxu0 0.0
      %956 = vmatpush1.msra.mxu0 0.0
      %957 = vmatprep.subr.mxu0 0.0
      %958 = vmatpush1.msra.mxu0 0.0
      %959 = vmatprep.subr.mxu0 0.0
      %960 = vmatpush1.msra.mxu0 0.0
      %961 = vmatprep.subr.mxu0 0.0
      %962 = vmatpush1.msra.mxu0 0.0
      %963 = vmatprep.subr.mxu0 0.0
      %964 = vmatpush1.msra.mxu0 0.0
      %965 = vmatprep.subr.mxu0 0.0
      %966 = vmatpush1.msra.mxu0 0.0
      %967 = vmatprep.subr.mxu0 0.0
      %968 = vmatpush1.msra.mxu0 0.0
      %969 = vmatprep.subr.mxu0 0.0
      %970 = vmatpush1.msra.mxu0 0.0
      %971 = vmatprep.subr.mxu0 0.0
      %972 = vmatpush1.msra.mxu0 0.0
      %973 = vmatprep.subr.mxu0 0.0
      %974 = vmatpush1.msra.mxu0 0.0
      %975 = vmatprep.subr.mxu0 0.0
      %976 = vmatpush1.msra.mxu0 0.0
      %977 = vmatprep.subr.mxu0 0.0
      %978 = vmatpush1.msra.mxu0 0.0
      %979 = vmatprep.subr.mxu0 0.0
      %980 = vmatpush1.msra.mxu0 0.0
      %981 = vmatprep.subr.mxu0 0.0
      %982 = vmatpush1.msra.mxu0 0.0
      %983 = vmatprep.subr.mxu0 0.0
      %984 = vmatpush1.msra.mxu0 0.0
      %985 = vmatprep.subr.mxu0 0.0
      %986 = vmatpush1.msra.mxu0 0.0
      %987 = vmatprep.subr.mxu0 0.0
      %988 = vmatpush1.msra.mxu0 0.0
      %989 = vmatprep.subr.mxu0 0.0
      %990 = vmatpush1.msra.mxu0 0.0
      %991 = vmatprep.subr.mxu0 0.0
      %992 = vmatpush1.msra.mxu0 0.0
      %993 = vmatprep.mubr.f32.mxu0 0.0
      %994 = vmatmul.mubr.f32.gmra.mrb[0].mxu0 %v924
      %v995 = vpop.f32.mrb[0].mxu0
      %v996 = vadd.f32 0.0, %v995
      %v997 = vpop.f32.mrb[0].mxu0
      %998 = vmatprep.mubr.f32.mxu0 0.0
      %999 = vmatmul.mubr.f32.gmra.mrb[0].mxu0 %v927
      %v1000 = vpop.f32.mrb[0].mxu0
      %v1001 = vadd.f32 0.0, %v1000
      %v1002 = vpop.f32.mrb[0].mxu0
      %1003 = vdwg.mxu0
      %1004 = vst.msk [vmem:[%s210] sm:$0xff] %vm235, %v753
      %1005 = vst.msk [vmem:[%s210 + $0x8] sm:$0xff] %vm235, %v758
      %1006 = vst.msk [vmem:[%s210 + $0x10] sm:$0xff] %vm235, %v834
      %1007 = vst.msk [vmem:[%s210 + $0x18] sm:$0xff] %vm235, %v839
      %1008 = vst.msk [vmem:[%s210 + $0x20] sm:$0xff] %vm235, %v915
      %1009 = vst.msk [vmem:[%s210 + $0x28] sm:$0xff] %vm235, %v920
      %1010 = vst.msk [vmem:[%s210 + $0x30] sm:$0xff] %vm235, %v996
      %1011 = vst.msk [vmem:[%s210 + $0x38] sm:$0xff] %vm235, %v1001
      %p1012 = scmp.lt.s32.totalorder %s14, 1
      %s1013 = scalar_select %p1012, %s14, 1
      %s1014 = smul.addr %s1013, 8
      %s1015 = smul.addr %s1014, 8
      %s1016 = scalar_lea.vmem %s3, %s1015
      // Predicated region
      $region33: #{multi_head_attention_module.4} parent=31 // pred_check
        %p1017 = pneg %p110
      $region34: #{multi_head_attention_module.4} parent=31 // pred_check_branch
        %1019 = sbr.rel (%p1017) target = $region36
      $region35: #{multi_head_attention_module.4} parent=31 // pred_region
        _
      $region36: #{multi_head_attention_module.4} parent=31 // pred_fallthru
        _
    $region32: #{multi_head_attention_module.4} parent=5 // pred_fallthru
      _
    %p1020 = scmp.le.s32.totalorder 2, %s9
    // Predicated region
    $region37: #{multi_head_attention_module.4} parent=5 // pred_check
      %p1021 = pneg %p1020
    $region38: #{multi_head_attention_module.4} parent=5 // pred_check_branch
      %1023 = sbr.rel (%p1021) target = $region40
    $region39: #{multi_head_attention_module.4} parent=5 // pred_region
      %s1024 = ssub.s32 %s9, 2
      // Predicated region
      $region41: #{multi_head_attention_module.4} parent=39 // pred_check
        %p1025 = pneg %p116
      $region42: #{multi_head_attention_module.4} parent=39 // pred_check_branch
        %1027 = sbr.rel (%p1025) target = $region44
      $region43: #{multi_head_attention_module.4} parent=39 // pred_region
        %p1028 = scmp.lt.s32.totalorder %s15, 1
        %s1029 = scalar_select %p1028, %s15, 1
        %s1030 = smul.addr %s1029, 8
        %s1031 = smul.addr %s1030, 8
        %s1032 = scalar_lea.vmem %s3, %s1031
      $region44: #{multi_head_attention_module.4} parent=39 // pred_fallthru
        _
    $region40: #{multi_head_attention_module.4} parent=5 // pred_fallthru
      _
  $region6: #{multi_head_attention_module.4} parent=0 // loop_footer
    %s13 = sadd.s32 1, %s9
  $region7: #{multi_head_attention_module.4} parent=0 // loop_footer_branch
    %8 = sbr.rel target = $region3
  $region8: #{multi_head_attention_module.4} parent=0 // loop_exit
    _

</llo_original>
